<compile_context>
chip_gen: v5e
topology: v5e:2x2
jax: 0.10.0
libtpu: 0.0.40
codegen_flags: <defaults>
</compile_context>

<pallas_src>
import functools

import jax
import jax.numpy as jnp
from jax import lax
from jax.experimental import pallas as pl
from jax.experimental.pallas import tpu as pltpu


# ---------------------------------------------------------------------------
# Fused Pallas kernel: expand(1x1) -> dw(3x3) -> project(1x1), all in VMEM
# ---------------------------------------------------------------------------

def _fused_inverted_residual_kernel(
        x_ref, w1_ref, s1_ref, b1_ref, w2_ref, s2_ref, b2_ref,
        w3_ref, s3_ref, b3_ref, o_ref, xrows_ref, mid_ref,
        *, stride, th, H, W, Wo, use_res):
    cin = x_ref.shape[-1]
    mid = w1_ref.shape[-1]
    cout = w3_ref.shape[-1]
    in_rows = (th - 1) * stride + 3          # input rows (incl. 1-row halo)
    wp = W + 2                               # padded width

    r = pl.program_id(1)                     # output-row tile index
    row0 = r * (th * stride) - 1             # first (padded) input row needed

    # ---- Stage 1: gather the needed input rows into VMEM (clamped) --------
    # Per-row VMEM->VMEM copies; the full image block is resident (its
    # BlockSpec index only changes with the batch axis, so it is DMA'd once
    # per image and reused across all row tiles).
    for j in range(in_rows):
        src = jnp.clip(row0 + j, 0, H - 1)
        xrows_ref[j:j + 1, :, :] = x_ref[0, pl.ds(src, 1), :, :]

    # ---- Stage 2: 1x1 expand + BN + ReLU (one MXU matmul per tile) ---------
    xs = xrows_ref[...].reshape(in_rows * W, cin)
    y = jnp.dot(xs, w1_ref[...], preferred_element_type=jnp.float32)
    y = jnp.maximum(y * s1_ref[...] + b1_ref[...], 0.0)
    y = y.reshape(in_rows, W, mid)

    # Padded expanded activation lives only in this VMEM scratch.
    mid_ref[...] = jnp.zeros_like(mid_ref)       # zero left/right halo columns
    mid_ref[:, 1:W + 1, :] = y

    # Rows that fall outside [0, H) correspond to the depthwise zero padding:
    # at most one row at the top (only for the first tile) and one at the
    # bottom (only for the last tile) -> zero them after the store.
    @pl.when(row0 < 0)
    def _zero_top():
        mid_ref[0:1, :, :] = jnp.zeros((1, wp, mid), jnp.float32)

    @pl.when(row0 + in_rows > H)
    def _zero_bottom():
        mid_ref[in_rows - 1:in_rows, :, :] = jnp.zeros((1, wp, mid), jnp.float32)

    # ---- Stage 3: 3x3 depthwise conv + BN + ReLU ---------------------------
    m = mid_ref[...]                          # (in_rows, W+2, mid)
    w2 = w2_ref[...]                          # (3, 3, mid)
    acc = jnp.zeros((th, Wo, mid), jnp.float32)
    if stride == 1:
        for ky in range(3):
            for kx in range(3):
                acc = acc + m[ky:ky + th, kx:kx + Wo, :] * w2[ky, kx, :]
    else:
        # Split once into even/odd row & column planes (4 strided slices
        # instead of 9 sublane-strided gathers); every tap is then contiguous.
        planes = {}
        for ro in (0, 1):
            for co in (0, 1):
                planes[(ro, co)] = lax.slice(
                    m, (ro, co, 0), (in_rows, wp, mid), (2, 2, 1))
        for ky in range(3):
            for kx in range(3):
                p = planes[(ky % 2, kx % 2)]
                acc = acc + (p[ky // 2:ky // 2 + th, kx // 2:kx // 2 + Wo, :]
                             * w2[ky, kx, :])
    y2 = jnp.maximum(acc * s2_ref[...] + b2_ref[...], 0.0)

    # ---- Stage 4: 1x1 project + BN (+ fused residual) ----------------------
    out = jnp.dot(y2.reshape(th * Wo, mid), w3_ref[...],
                  preferred_element_type=jnp.float32)
    out = out * s3_ref[...] + b3_ref[...]
    if use_res:
        # stride == 1 and cin == cout here, so residual rows == output rows.
        start = pl.multiple_of(r * th, th)
        res = x_ref[0, pl.ds(start, th), :, :]
        out = out + res.reshape(th * W, cin).astype(jnp.float32)
    o_ref[0] = out.reshape(th, Wo, cout).astype(o_ref.dtype)


# ---------------------------------------------------------------------------
# pallas_call wrapper
# ---------------------------------------------------------------------------

def _pick_row_tile(ho):
    for cand in (8, 16, 4, 2):
        if ho % cand == 0:
            return cand
    return ho if ho <= 32 else 1


def inverted_residual_fused(x_nhwc, w1, s1, b1, w2, s2, b2, w3, s3, b3,
                            *, stride, use_res):
    n, h, w, cin = x_nhwc.shape
    mid = w1.shape[1]
    cout = w3.shape[1]
    ho = (h + 2 - 3) // stride + 1
    wo = (w + 2 - 3) // stride + 1
    th = _pick_row_tile(ho)
    n_rt = ho // th
    in_rows = (th - 1) * stride + 3

    kernel = functools.partial(
        _fused_inverted_residual_kernel,
        stride=stride, th=th, H=h, W=w, Wo=wo, use_res=use_res)

    flops = (2 * n * n_rt * in_rows * w * cin * mid      # expand (incl. halo)
             + 2 * n * ho * wo * 9 * mid                  # depthwise
             + 2 * n * ho * wo * mid * cout)              # project
    bytes_accessed = 4 * (n * h * w * cin + n * ho * wo * cout
                          + cin * mid + 9 * mid + mid * cout
                          + 2 * (2 * mid + cout))
    cost = pl.CostEstimate(flops=flops, transcendentals=0,
                           bytes_accessed=bytes_accessed)

    return pl.pallas_call(
        kernel,
        out_shape=jax.ShapeDtypeStruct((n, ho, wo, cout), x_nhwc.dtype),
        grid=(n, n_rt),
        in_specs=[
            pl.BlockSpec((1, h, w, cin), lambda b, r: (b, 0, 0, 0)),   # x
            pl.BlockSpec((cin, mid), lambda b, r: (0, 0)),             # w1
            pl.BlockSpec((1, mid), lambda b, r: (0, 0)),               # s1
            pl.BlockSpec((1, mid), lambda b, r: (0, 0)),               # b1
            pl.BlockSpec((3, 3, mid), lambda b, r: (0, 0, 0)),         # w2
            pl.BlockSpec((1, 1, mid), lambda b, r: (0, 0, 0)),         # s2
            pl.BlockSpec((1, 1, mid), lambda b, r: (0, 0, 0)),         # b2
            pl.BlockSpec((mid, cout), lambda b, r: (0, 0)),            # w3
            pl.BlockSpec((1, cout), lambda b, r: (0, 0)),              # s3
            pl.BlockSpec((1, cout), lambda b, r: (0, 0)),              # b3
        ],
        out_specs=pl.BlockSpec((1, th, wo, cout), lambda b, r: (b, r, 0, 0)),
        scratch_shapes=[
            pltpu.VMEM((in_rows, w, cin), x_nhwc.dtype),       # gathered rows
            pltpu.VMEM((in_rows, w + 2, mid), jnp.float32),    # padded expand
        ],
        compiler_params=pltpu.CompilerParams(
            dimension_semantics=("parallel", "parallel"),
            vmem_limit_bytes=32 * 1024 * 1024),
        cost_estimate=cost,
    )(x_nhwc, w1, s1.reshape(1, mid), b1.reshape(1, mid),
      w2, s2.reshape(1, 1, mid), b2.reshape(1, 1, mid),
      w3, s3.reshape(1, cout), b3.reshape(1, cout))


# ---------------------------------------------------------------------------
# Module
# ---------------------------------------------------------------------------

def fold_bn(gamma, beta, mean, var, eps=1e-5):
    scale = gamma / jnp.sqrt(var + eps)
    bias = beta - mean * scale
    return scale, bias


class InvertedResidualPallas:
    def __init__(self, inp, oup, stride, expand_ratio, key):
        assert stride in (1, 2)
        self.stride = stride
        self.use_res_connect = (stride == 1 and inp == oup)
        mid = inp * expand_ratio
        self.inp, self.oup, self.mid = inp, oup, mid

        keys = jax.random.split(key, 15)
        # Conv weights in PyTorch layouts, converted to kernel layouts.
        w1 = jax.random.normal(keys[0], (mid, inp, 1, 1), jnp.float32) * 0.1
        w2 = jax.random.normal(keys[1], (mid, 1, 3, 3), jnp.float32) * 0.1
        w3 = jax.random.normal(keys[2], (oup, mid, 1, 1), jnp.float32) * 0.1
        self.w1 = w1[:, :, 0, 0].T                    # (inp, mid)
        self.w2 = jnp.transpose(w2[:, 0], (1, 2, 0))  # (3, 3, mid)
        self.w3 = w3[:, :, 0, 0].T                    # (mid, oup)

        def bn_params(kg, kb, km, kv, c):
            gamma = jax.random.uniform(kg, (c,), jnp.float32, 0.5, 1.5)
            beta = jax.random.normal(kb, (c,), jnp.float32) * 0.1
            mean = jax.random.normal(km, (c,), jnp.float32) * 0.1
            var = jax.random.uniform(kv, (c,), jnp.float32, 0.5, 1.5)
            return fold_bn(gamma, beta, mean, var)

        self.s1, self.b1 = bn_params(keys[3], keys[4], keys[5], keys[6], mid)
        self.s2, self.b2 = bn_params(keys[7], keys[8], keys[9], keys[10], mid)
        self.s3, self.b3 = bn_params(keys[11], keys[12], keys[13], keys[14], oup)

    def __call__(self, x_nchw):
        # NCHW <-> NHWC kept for PyTorch-interface fidelity; drop if the
        # surrounding model already runs NHWC.
        x = jnp.transpose(x_nchw, (0, 2, 3, 1))
        out = inverted_residual_fused(
            x, self.w1, self.s1, self.b1, self.w2, self.s2, self.b2,
            self.w3, self.s3, self.b3,
            stride=self.stride, use_res=self.use_res_connect)
        return jnp.transpose(out, (0, 3, 1, 2))


# ---------------------------------------------------------------------------
# Pure-JAX reference (independent of the kernel) for verification
# ---------------------------------------------------------------------------

def reference_forward(mod, x_nchw):
    x = jnp.transpose(x_nchw, (0, 2, 3, 1))
    h = jnp.einsum('nhwc,cd->nhwd', x, mod.w1) * mod.s1 + mod.b1
    h = jnp.maximum(h, 0.0)
    dw = mod.w2[:, :, None, :]  # (3,3,1,mid) HWIO, depthwise
    h = lax.conv_general_dilated(
        h, dw, window_strides=(mod.stride, mod.stride),
        padding=((1, 1), (1, 1)),
        dimension_numbers=('NHWC', 'HWIO', 'NHWC'),
        feature_group_count=mod.mid)
    h = jnp.maximum(h * mod.s2 + mod.b2, 0.0)
    out = jnp.einsum('nhwc,cd->nhwd', h, mod.w3) * mod.s3 + mod.b3
    if mod.use_res_connect:
        out = out + x
    return jnp.transpose(out, (0, 3, 1, 2))


if __name__ == "__main__":
    key = jax.random.PRNGKey(0)
    kx, kp1, kp2 = jax.random.split(key, 3)

    # Case 1: stride=1, residual path active.
    n, inp, oup, stride, expand = 2, 4, 4, 1, 6
    h = w = 16
    x = jax.random.normal(kx, (n, inp, h, w), jnp.float32)
    block = InvertedResidualPallas(inp, oup, stride, expand, kp1)
    out = jax.block_until_ready(block(x))
    ref = reference_forward(block, x)
    assert out.shape == (n, oup, h, w), out.shape
    assert jnp.allclose(out, ref, rtol=1e-3, atol=1e-3), float(
        jnp.max(jnp.abs(out - ref)))

    # Case 2: stride=2, no residual (inp != oup) — exercises the even/odd
    # plane depthwise path and boundary handling with a single row tile.
    inp2, oup2, stride2 = 4, 8, 2
    block2 = InvertedResidualPallas(inp2, oup2, stride2, expand, kp2)
    x2 = jax.random.normal(kx, (n, inp2, h, w), jnp.float32)
    out2 = jax.block_until_ready(block2(x2))
    ref2 = reference_forward(block2, x2)
    assert out2.shape == (n, oup2, h // 2, w // 2), out2.shape
    assert jnp.allclose(out2, ref2, rtol=1e-3, atol=1e-3), float(
        jnp.max(jnp.abs(out2 - ref2)))

    print("KERNEL_OK")
</pallas_src>

<mosaic_0001>
module attributes {stable_mosaic.version = 11 : i64} {
  func.func @_fused_inverted_residual_kernel(%arg0: i32, %arg1: i32, %arg2: memref<1x16x16x4xf32, #tpu.memory_space<vmem>>, %arg3: memref<4x24xf32, #tpu.memory_space<vmem>>, %arg4: memref<1x24xf32, #tpu.memory_space<vmem>>, %arg5: memref<1x24xf32, #tpu.memory_space<vmem>>, %arg6: memref<3x3x24xf32, #tpu.memory_space<vmem>>, %arg7: memref<1x1x24xf32, #tpu.memory_space<vmem>>, %arg8: memref<1x1x24xf32, #tpu.memory_space<vmem>>, %arg9: memref<24x4xf32, #tpu.memory_space<vmem>>, %arg10: memref<1x4xf32, #tpu.memory_space<vmem>>, %arg11: memref<1x4xf32, #tpu.memory_space<vmem>>, %arg12: memref<1x8x16x4xf32, #tpu.memory_space<vmem>>, %arg13: memref<10x16x4xf32, #tpu.memory_space<vmem>>, %arg14: memref<10x18x24xf32, #tpu.memory_space<vmem>>) attributes {dimension_semantics = [#tpu.dimension_semantics<parallel>, #tpu.dimension_semantics<parallel>], iteration_bounds = array<i64: 2, 2>, scalar_prefetch = 0 : i64, scratch_operands = 2 : i64, tpu.core_type = #tpu.core_type<tc>, window_params = [{transform_indices = @transform_0, window_bounds = array<i64: 1, 16, 16, 4>}, {pipeline_mode = #tpu.pipeline_mode<synchronous>, transform_indices = @transform_1, window_bounds = array<i64: 4, 24>}, {pipeline_mode = #tpu.pipeline_mode<synchronous>, transform_indices = @transform_2, window_bounds = array<i64: 1, 24>}, {pipeline_mode = #tpu.pipeline_mode<synchronous>, transform_indices = @transform_3, window_bounds = array<i64: 1, 24>}, {pipeline_mode = #tpu.pipeline_mode<synchronous>, transform_indices = @transform_4, window_bounds = array<i64: 3, 3, 24>}, {pipeline_mode = #tpu.pipeline_mode<synchronous>, transform_indices = @transform_5, window_bounds = array<i64: 1, 1, 24>}, {pipeline_mode = #tpu.pipeline_mode<synchronous>, transform_indices = @transform_6, window_bounds = array<i64: 1, 1, 24>}, {pipeline_mode = #tpu.pipeline_mode<synchronous>, transform_indices = @transform_7, window_bounds = array<i64: 24, 4>}, {pipeline_mode = #tpu.pipeline_mode<synchronous>, transform_indices = @transform_8, window_bounds = array<i64: 1, 4>}, {pipeline_mode = #tpu.pipeline_mode<synchronous>, transform_indices = @transform_9, window_bounds = array<i64: 1, 4>}, {transform_indices = @transform_10, window_bounds = array<i64: 1, 8, 16, 4>}]} {
    %c8_i32 = arith.constant 8 : i32
    %0 = arith.muli %arg1, %c8_i32 : i32
    %c1_i32 = arith.constant 1 : i32
    %1 = arith.subi %0, %c1_i32 : i32
    %c0_i32 = arith.constant 0 : i32
    %2 = arith.addi %1, %c0_i32 : i32
    %c0_i32_0 = arith.constant 0 : i32
    %c15_i32 = arith.constant 15 : i32
    %3 = arith.maxsi %c0_i32_0, %2 : i32
    %4 = arith.minsi %c15_i32, %3 : i32
    %c0 = arith.constant 0 : index
    %5 = arith.index_cast %4 : i32 to index
    %c0_1 = arith.constant 0 : index
    %c0_2 = arith.constant 0 : index
    %6 = vector.load %arg2[%c0, %5, %c0_1, %c0_2] : memref<1x16x16x4xf32, #tpu.memory_space<vmem>>, vector<1x1x16x4xf32>
    %7 = vector.shape_cast %6 : vector<1x1x16x4xf32> to vector<1x16x4xf32>
    %c0_3 = arith.constant 0 : index
    %c0_4 = arith.constant 0 : index
    %c0_5 = arith.constant 0 : index
    %8 = vector.load %arg13[%c0_3, %c0_4, %c0_5] : memref<10x16x4xf32, #tpu.memory_space<vmem>>, vector<1x16x4xf32>
    tpu.vector_store %arg13[%c0_3, %c0_4, %c0_5], %7 {strides = array<i32>} : memref<10x16x4xf32, #tpu.memory_space<vmem>>, vector<1x16x4xf32>,
    %c1_i32_6 = arith.constant 1 : i32
    %9 = arith.addi %1, %c1_i32_6 : i32
    %c0_i32_7 = arith.constant 0 : i32
    %c15_i32_8 = arith.constant 15 : i32
    %10 = arith.maxsi %c0_i32_7, %9 : i32
    %11 = arith.minsi %c15_i32_8, %10 : i32
    %c0_9 = arith.constant 0 : index
    %12 = arith.index_cast %11 : i32 to index
    %c0_10 = arith.constant 0 : index
    %c0_11 = arith.constant 0 : index
    %13 = vector.load %arg2[%c0_9, %12, %c0_10, %c0_11] : memref<1x16x16x4xf32, #tpu.memory_space<vmem>>, vector<1x1x16x4xf32>
    %14 = vector.shape_cast %13 : vector<1x1x16x4xf32> to vector<1x16x4xf32>
    %c1 = arith.constant 1 : index
    %c0_12 = arith.constant 0 : index
    %c0_13 = arith.constant 0 : index
    %15 = vector.load %arg13[%c1, %c0_12, %c0_13] : memref<10x16x4xf32, #tpu.memory_space<vmem>>, vector<1x16x4xf32>
    tpu.vector_store %arg13[%c1, %c0_12, %c0_13], %14 {strides = array<i32>} : memref<10x16x4xf32, #tpu.memory_space<vmem>>, vector<1x16x4xf32>,
    %c2_i32 = arith.constant 2 : i32
    %16 = arith.addi %1, %c2_i32 : i32
    %c0_i32_14 = arith.constant 0 : i32
    %c15_i32_15 = arith.constant 15 : i32
    %17 = arith.maxsi %c0_i32_14, %16 : i32
    %18 = arith.minsi %c15_i32_15, %17 : i32
    %c0_16 = arith.constant 0 : index
    %19 = arith.index_cast %18 : i32 to index
    %c0_17 = arith.constant 0 : index
    %c0_18 = arith.constant 0 : index
    %20 = vector.load %arg2[%c0_16, %19, %c0_17, %c0_18] : memref<1x16x16x4xf32, #tpu.memory_space<vmem>>, vector<1x1x16x4xf32>
    %21 = vector.shape_cast %20 : vector<1x1x16x4xf32> to vector<1x16x4xf32>
    %c2 = arith.constant 2 : index
    %c0_19 = arith.constant 0 : index
    %c0_20 = arith.constant 0 : index
    %22 = vector.load %arg13[%c2, %c0_19, %c0_20] : memref<10x16x4xf32, #tpu.memory_space<vmem>>, vector<1x16x4xf32>
    tpu.vector_store %arg13[%c2, %c0_19, %c0_20], %21 {strides = array<i32>} : memref<10x16x4xf32, #tpu.memory_space<vmem>>, vector<1x16x4xf32>,
    %c3_i32 = arith.constant 3 : i32
    %23 = arith.addi %1, %c3_i32 : i32
    %c0_i32_21 = arith.constant 0 : i32
    %c15_i32_22 = arith.constant 15 : i32
    %24 = arith.maxsi %c0_i32_21, %23 : i32
    %25 = arith.minsi %c15_i32_22, %24 : i32
    %c0_23 = arith.constant 0 : index
    %26 = arith.index_cast %25 : i32 to index
    %c0_24 = arith.constant 0 : index
    %c0_25 = arith.constant 0 : index
    %27 = vector.load %arg2[%c0_23, %26, %c0_24, %c0_25] : memref<1x16x16x4xf32, #tpu.memory_space<vmem>>, vector<1x1x16x4xf32>
    %28 = vector.shape_cast %27 : vector<1x1x16x4xf32> to vector<1x16x4xf32>
    %c3 = arith.constant 3 : index
    %c0_26 = arith.constant 0 : index
    %c0_27 = arith.constant 0 : index
    %29 = vector.load %arg13[%c3, %c0_26, %c0_27] : memref<10x16x4xf32, #tpu.memory_space<vmem>>, vector<1x16x4xf32>
    tpu.vector_store %arg13[%c3, %c0_26, %c0_27], %28 {strides = array<i32>} : memref<10x16x4xf32, #tpu.memory_space<vmem>>, vector<1x16x4xf32>,
    %c4_i32 = arith.constant 4 : i32
    %30 = arith.addi %1, %c4_i32 : i32
    %c0_i32_28 = arith.constant 0 : i32
    %c15_i32_29 = arith.constant 15 : i32
    %31 = arith.maxsi %c0_i32_28, %30 : i32
    %32 = arith.minsi %c15_i32_29, %31 : i32
    %c0_30 = arith.constant 0 : index
    %33 = arith.index_cast %32 : i32 to index
    %c0_31 = arith.constant 0 : index
    %c0_32 = arith.constant 0 : index
    %34 = vector.load %arg2[%c0_30, %33, %c0_31, %c0_32] : memref<1x16x16x4xf32, #tpu.memory_space<vmem>>, vector<1x1x16x4xf32>
    %35 = vector.shape_cast %34 : vector<1x1x16x4xf32> to vector<1x16x4xf32>
    %c4 = arith.constant 4 : index
    %c0_33 = arith.constant 0 : index
    %c0_34 = arith.constant 0 : index
    %36 = vector.load %arg13[%c4, %c0_33, %c0_34] : memref<10x16x4xf32, #tpu.memory_space<vmem>>, vector<1x16x4xf32>
    tpu.vector_store %arg13[%c4, %c0_33, %c0_34], %35 {strides = array<i32>} : memref<10x16x4xf32, #tpu.memory_space<vmem>>, vector<1x16x4xf32>,
    %c5_i32 = arith.constant 5 : i32
    %37 = arith.addi %1, %c5_i32 : i32
    %c0_i32_35 = arith.constant 0 : i32
    %c15_i32_36 = arith.constant 15 : i32
    %38 = arith.maxsi %c0_i32_35, %37 : i32
    %39 = arith.minsi %c15_i32_36, %38 : i32
    %c0_37 = arith.constant 0 : index
    %40 = arith.index_cast %39 : i32 to index
    %c0_38 = arith.constant 0 : index
    %c0_39 = arith.constant 0 : index
    %41 = vector.load %arg2[%c0_37, %40, %c0_38, %c0_39] : memref<1x16x16x4xf32, #tpu.memory_space<vmem>>, vector<1x1x16x4xf32>
    %42 = vector.shape_cast %41 : vector<1x1x16x4xf32> to vector<1x16x4xf32>
    %c5 = arith.constant 5 : index
    %c0_40 = arith.constant 0 : index
    %c0_41 = arith.constant 0 : index
    %43 = vector.load %arg13[%c5, %c0_40, %c0_41] : memref<10x16x4xf32, #tpu.memory_space<vmem>>, vector<1x16x4xf32>
    tpu.vector_store %arg13[%c5, %c0_40, %c0_41], %42 {strides = array<i32>} : memref<10x16x4xf32, #tpu.memory_space<vmem>>, vector<1x16x4xf32>,
    %c6_i32 = arith.constant 6 : i32
    %44 = arith.addi %1, %c6_i32 : i32
    %c0_i32_42 = arith.constant 0 : i32
    %c15_i32_43 = arith.constant 15 : i32
    %45 = arith.maxsi %c0_i32_42, %44 : i32
    %46 = arith.minsi %c15_i32_43, %45 : i32
    %c0_44 = arith.constant 0 : index
    %47 = arith.index_cast %46 : i32 to index
    %c0_45 = arith.constant 0 : index
    %c0_46 = arith.constant 0 : index
    %48 = vector.load %arg2[%c0_44, %47, %c0_45, %c0_46] : memref<1x16x16x4xf32, #tpu.memory_space<vmem>>, vector<1x1x16x4xf32>
    %49 = vector.shape_cast %48 : vector<1x1x16x4xf32> to vector<1x16x4xf32>
    %c6 = arith.constant 6 : index
    %c0_47 = arith.constant 0 : index
    %c0_48 = arith.constant 0 : index
    %50 = vector.load %arg13[%c6, %c0_47, %c0_48] : memref<10x16x4xf32, #tpu.memory_space<vmem>>, vector<1x16x4xf32>
    tpu.vector_store %arg13[%c6, %c0_47, %c0_48], %49 {strides = array<i32>} : memref<10x16x4xf32, #tpu.memory_space<vmem>>, vector<1x16x4xf32>,
    %c7_i32 = arith.constant 7 : i32
    %51 = arith.addi %1, %c7_i32 : i32
    %c0_i32_49 = arith.constant 0 : i32
    %c15_i32_50 = arith.constant 15 : i32
    %52 = arith.maxsi %c0_i32_49, %51 : i32
    %53 = arith.minsi %c15_i32_50, %52 : i32
    %c0_51 = arith.constant 0 : index
    %54 = arith.index_cast %53 : i32 to index
    %c0_52 = arith.constant 0 : index
    %c0_53 = arith.constant 0 : index
    %55 = vector.load %arg2[%c0_51, %54, %c0_52, %c0_53] : memref<1x16x16x4xf32, #tpu.memory_space<vmem>>, vector<1x1x16x4xf32>
    %56 = vector.shape_cast %55 : vector<1x1x16x4xf32> to vector<1x16x4xf32>
    %c7 = arith.constant 7 : index
    %c0_54 = arith.constant 0 : index
    %c0_55 = arith.constant 0 : index
    %57 = vector.load %arg13[%c7, %c0_54, %c0_55] : memref<10x16x4xf32, #tpu.memory_space<vmem>>, vector<1x16x4xf32>
    tpu.vector_store %arg13[%c7, %c0_54, %c0_55], %56 {strides = array<i32>} : memref<10x16x4xf32, #tpu.memory_space<vmem>>, vector<1x16x4xf32>,
    %c8_i32_56 = arith.constant 8 : i32
    %58 = arith.addi %1, %c8_i32_56 : i32
    %c0_i32_57 = arith.constant 0 : i32
    %c15_i32_58 = arith.constant 15 : i32
    %59 = arith.maxsi %c0_i32_57, %58 : i32
    %60 = arith.minsi %c15_i32_58, %59 : i32
    %c0_59 = arith.constant 0 : index
    %61 = arith.index_cast %60 : i32 to index
    %c0_60 = arith.constant 0 : index
    %c0_61 = arith.constant 0 : index
    %62 = vector.load %arg2[%c0_59, %61, %c0_60, %c0_61] : memref<1x16x16x4xf32, #tpu.memory_space<vmem>>, vector<1x1x16x4xf32>
    %63 = vector.shape_cast %62 : vector<1x1x16x4xf32> to vector<1x16x4xf32>
    %c8 = arith.constant 8 : index
    %c0_62 = arith.constant 0 : index
    %c0_63 = arith.constant 0 : index
    %64 = vector.load %arg13[%c8, %c0_62, %c0_63] : memref<10x16x4xf32, #tpu.memory_space<vmem>>, vector<1x16x4xf32>
    tpu.vector_store %arg13[%c8, %c0_62, %c0_63], %63 {strides = array<i32>} : memref<10x16x4xf32, #tpu.memory_space<vmem>>, vector<1x16x4xf32>,
    %c9_i32 = arith.constant 9 : i32
    %65 = arith.addi %1, %c9_i32 : i32
    %c0_i32_64 = arith.constant 0 : i32
    %c15_i32_65 = arith.constant 15 : i32
    %66 = arith.maxsi %c0_i32_64, %65 : i32
    %67 = arith.minsi %c15_i32_65, %66 : i32
    %c0_66 = arith.constant 0 : index
    %68 = arith.index_cast %67 : i32 to index
    %c0_67 = arith.constant 0 : index
    %c0_68 = arith.constant 0 : index
    %69 = vector.load %arg2[%c0_66, %68, %c0_67, %c0_68] : memref<1x16x16x4xf32, #tpu.memory_space<vmem>>, vector<1x1x16x4xf32>
    %70 = vector.shape_cast %69 : vector<1x1x16x4xf32> to vector<1x16x4xf32>
    %c9 = arith.constant 9 : index
    %c0_69 = arith.constant 0 : index
    %c0_70 = arith.constant 0 : index
    %71 = vector.load %arg13[%c9, %c0_69, %c0_70] : memref<10x16x4xf32, #tpu.memory_space<vmem>>, vector<1x16x4xf32>
    tpu.vector_store %arg13[%c9, %c0_69, %c0_70], %70 {strides = array<i32>} : memref<10x16x4xf32, #tpu.memory_space<vmem>>, vector<1x16x4xf32>,
    %c0_71 = arith.constant 0 : index
    %c0_72 = arith.constant 0 : index
    %c0_73 = arith.constant 0 : index
    %72 = vector.load %arg13[%c0_71, %c0_72, %c0_73] : memref<10x16x4xf32, #tpu.memory_space<vmem>>, vector<10x16x4xf32>
    %73 = vector.shape_cast %72 : vector<10x16x4xf32> to vector<160x4xf32>
    %c0_74 = arith.constant 0 : index
    %c0_75 = arith.constant 0 : index
    %74 = vector.load %arg3[%c0_74, %c0_75] : memref<4x24xf32, #tpu.memory_space<vmem>>, vector<4x24xf32>
    %cst = arith.constant dense<0.000000e+00> : vector<160x24xf32>
    %75 = tpu.matmul %73, %74, %cst {dimension_numbers = #tpu.dot_dimension_numbers<[1], [0], [0], [1], [0, 0, 1, 1], [], []>} : vector<160x4xf32>, vector<4x24xf32>, vector<160x24xf32> -> vector<160x24xf32>
    %c0_76 = arith.constant 0 : index
    %c0_77 = arith.constant 0 : index
    %76 = vector.load %arg4[%c0_76, %c0_77] : memref<1x24xf32, #tpu.memory_space<vmem>>, vector<1x24xf32>
    %77 = vector.broadcast %76 : vector<1x24xf32> to vector<160x24xf32>
    %78 = arith.mulf %75, %77 : vector<160x24xf32>
    %c0_78 = arith.constant 0 : index
    %c0_79 = arith.constant 0 : index
    %79 = vector.load %arg5[%c0_78, %c0_79] : memref<1x24xf32, #tpu.memory_space<vmem>>, vector<1x24xf32>
    %80 = vector.broadcast %79 : vector<1x24xf32> to vector<160x24xf32>
    %81 = arith.addf %78, %80 : vector<160x24xf32>
    %cst_80 = arith.constant 0.000000e+00 : f32
    %82 = vector.broadcast %cst_80 : f32 to vector<160x24xf32>
    %83 = arith.maximumf %81, %82 : vector<160x24xf32>
    %84 = vector.shape_cast %83 : vector<160x24xf32> to vector<10x16x24xf32>
    %cst_81 = arith.constant 0.000000e+00 : f32
    %85 = vector.broadcast %cst_81 : f32 to vector<10x18x24xf32>
    %c0_82 = arith.constant 0 : index
    %c0_83 = arith.constant 0 : index
    %c0_84 = arith.constant 0 : index
    %86 = vector.load %arg14[%c0_82, %c0_83, %c0_84] : memref<10x18x24xf32, #tpu.memory_space<vmem>>, vector<10x18x24xf32>
    tpu.vector_store %arg14[%c0_82, %c0_83, %c0_84], %85 {strides = array<i32>} : memref<10x18x24xf32, #tpu.memory_space<vmem>>, vector<10x18x24xf32>,
    %c0_85 = arith.constant 0 : index
    %c1_86 = arith.constant 1 : index
    %c0_87 = arith.constant 0 : index
    %87 = vector.load %arg14[%c0_85, %c1_86, %c0_87] : memref<10x18x24xf32, #tpu.memory_space<vmem>>, vector<10x16x24xf32>
    tpu.vector_store %arg14[%c0_85, %c1_86, %c0_87], %84 {strides = array<i32>} : memref<10x18x24xf32, #tpu.memory_space<vmem>>, vector<10x16x24xf32>,
    %c0_i32_88 = arith.constant 0 : i32
    %88 = arith.cmpi slt, %1, %c0_i32_88 : i32
    %89 = arith.extui %88 : i1 to i32
    %c0_i32_89 = arith.constant 0 : i32
    %90 = arith.cmpi ne, %89, %c0_i32_89 : i32
    scf.if %90 {
      %cst_120 = arith.constant 0.000000e+00 : f32
      %189 = vector.broadcast %cst_120 : f32 to vector<1x18x24xf32>
      %c0_121 = arith.constant 0 : index
      %c0_122 = arith.constant 0 : index
      %c0_123 = arith.constant 0 : index
      %190 = vector.load %arg14[%c0_121, %c0_122, %c0_123] : memref<10x18x24xf32, #tpu.memory_space<vmem>>, vector<1x18x24xf32>
      tpu.vector_store %arg14[%c0_121, %c0_122, %c0_123], %189 {strides = array<i32>} : memref<10x18x24xf32, #tpu.memory_space<vmem>>, vector<1x18x24xf32>,
    } else {
    }
    %c10_i32 = arith.constant 10 : i32
    %91 = arith.addi %1, %c10_i32 : i32
    %c16_i32 = arith.constant 16 : i32
    %92 = arith.cmpi sgt, %91, %c16_i32 : i32
    %93 = arith.extui %92 : i1 to i32
    %c0_i32_90 = arith.constant 0 : i32
    %94 = arith.cmpi ne, %93, %c0_i32_90 : i32
    scf.if %94 {
      %cst_120 = arith.constant 0.000000e+00 : f32
      %189 = vector.broadcast %cst_120 : f32 to vector<1x18x24xf32>
      %c9_121 = arith.constant 9 : index
      %c0_122 = arith.constant 0 : index
      %c0_123 = arith.constant 0 : index
      %190 = vector.load %arg14[%c9_121, %c0_122, %c0_123] : memref<10x18x24xf32, #tpu.memory_space<vmem>>, vector<1x18x24xf32>
      tpu.vector_store %arg14[%c9_121, %c0_122, %c0_123], %189 {strides = array<i32>} : memref<10x18x24xf32, #tpu.memory_space<vmem>>, vector<1x18x24xf32>,
    } else {
    }
    %c0_91 = arith.constant 0 : index
    %c0_92 = arith.constant 0 : index
    %c0_93 = arith.constant 0 : index
    %95 = vector.load %arg14[%c0_91, %c0_92, %c0_93] : memref<10x18x24xf32, #tpu.memory_space<vmem>>, vector<10x18x24xf32>
    %c0_94 = arith.constant 0 : index
    %c0_95 = arith.constant 0 : index
    %c0_96 = arith.constant 0 : index
    %96 = vector.load %arg6[%c0_94, %c0_95, %c0_96] : memref<3x3x24xf32, #tpu.memory_space<vmem>>, vector<3x3x24xf32>
    %cst_97 = arith.constant 0.000000e+00 : f32
    %97 = vector.broadcast %cst_97 : f32 to vector<8x16x24xf32>
    %98 = vector.extract_strided_slice %95 {offsets = [0, 0, 0], sizes = [8, 16, 24], strides = [1, 1, 1]} : vector<10x18x24xf32> to vector<8x16x24xf32>
    %99 = vector.extract_strided_slice %96 {offsets = [0, 0, 0], sizes = [1, 1, 24], strides = [1, 1, 1]} : vector<3x3x24xf32> to vector<1x1x24xf32>
    %100 = vector.shape_cast %99 : vector<1x1x24xf32> to vector<24xf32>
    %101 = vector.shape_cast %100 : vector<24xf32> to vector<1x1x24xf32>
    %102 = vector.broadcast %101 : vector<1x1x24xf32> to vector<8x16x24xf32>
    %103 = arith.mulf %98, %102 : vector<8x16x24xf32>
    %104 = arith.addf %97, %103 : vector<8x16x24xf32>
    %105 = vector.extract_strided_slice %95 {offsets = [0, 1, 0], sizes = [8, 16, 24], strides = [1, 1, 1]} : vector<10x18x24xf32> to vector<8x16x24xf32>
    %106 = vector.extract_strided_slice %96 {offsets = [0, 1, 0], sizes = [1, 1, 24], strides = [1, 1, 1]} : vector<3x3x24xf32> to vector<1x1x24xf32>
    %107 = vector.shape_cast %106 : vector<1x1x24xf32> to vector<24xf32>
    %108 = vector.shape_cast %107 : vector<24xf32> to vector<1x1x24xf32>
    %109 = vector.broadcast %108 : vector<1x1x24xf32> to vector<8x16x24xf32>
    %110 = arith.mulf %105, %109 : vector<8x16x24xf32>
    %111 = arith.addf %104, %110 : vector<8x16x24xf32>
    %112 = vector.extract_strided_slice %95 {offsets = [0, 2, 0], sizes = [8, 16, 24], strides = [1, 1, 1]} : vector<10x18x24xf32> to vector<8x16x24xf32>
    %113 = vector.extract_strided_slice %96 {offsets = [0, 2, 0], sizes = [1, 1, 24], strides = [1, 1, 1]} : vector<3x3x24xf32> to vector<1x1x24xf32>
    %114 = vector.shape_cast %113 : vector<1x1x24xf32> to vector<24xf32>
    %115 = vector.shape_cast %114 : vector<24xf32> to vector<1x1x24xf32>
    %116 = vector.broadcast %115 : vector<1x1x24xf32> to vector<8x16x24xf32>
    %117 = arith.mulf %112, %116 : vector<8x16x24xf32>
    %118 = arith.addf %111, %117 : vector<8x16x24xf32>
    %119 = vector.extract_strided_slice %95 {offsets = [1, 0, 0], sizes = [8, 16, 24], strides = [1, 1, 1]} : vector<10x18x24xf32> to vector<8x16x24xf32>
    %120 = vector.extract_strided_slice %96 {offsets = [1, 0, 0], sizes = [1, 1, 24], strides = [1, 1, 1]} : vector<3x3x24xf32> to vector<1x1x24xf32>
    %121 = vector.shape_cast %120 : vector<1x1x24xf32> to vector<24xf32>
    %122 = vector.shape_cast %121 : vector<24xf32> to vector<1x1x24xf32>
    %123 = vector.broadcast %122 : vector<1x1x24xf32> to vector<8x16x24xf32>
    %124 = arith.mulf %119, %123 : vector<8x16x24xf32>
    %125 = arith.addf %118, %124 : vector<8x16x24xf32>
    %126 = vector.extract_strided_slice %95 {offsets = [1, 1, 0], sizes = [8, 16, 24], strides = [1, 1, 1]} : vector<10x18x24xf32> to vector<8x16x24xf32>
    %127 = vector.extract_strided_slice %96 {offsets = [1, 1, 0], sizes = [1, 1, 24], strides = [1, 1, 1]} : vector<3x3x24xf32> to vector<1x1x24xf32>
    %128 = vector.shape_cast %127 : vector<1x1x24xf32> to vector<24xf32>
    %129 = vector.shape_cast %128 : vector<24xf32> to vector<1x1x24xf32>
    %130 = vector.broadcast %129 : vector<1x1x24xf32> to vector<8x16x24xf32>
    %131 = arith.mulf %126, %130 : vector<8x16x24xf32>
    %132 = arith.addf %125, %131 : vector<8x16x24xf32>
    %133 = vector.extract_strided_slice %95 {offsets = [1, 2, 0], sizes = [8, 16, 24], strides = [1, 1, 1]} : vector<10x18x24xf32> to vector<8x16x24xf32>
    %134 = vector.extract_strided_slice %96 {offsets = [1, 2, 0], sizes = [1, 1, 24], strides = [1, 1, 1]} : vector<3x3x24xf32> to vector<1x1x24xf32>
    %135 = vector.shape_cast %134 : vector<1x1x24xf32> to vector<24xf32>
    %136 = vector.shape_cast %135 : vector<24xf32> to vector<1x1x24xf32>
    %137 = vector.broadcast %136 : vector<1x1x24xf32> to vector<8x16x24xf32>
    %138 = arith.mulf %133, %137 : vector<8x16x24xf32>
    %139 = arith.addf %132, %138 : vector<8x16x24xf32>
    %140 = vector.extract_strided_slice %95 {offsets = [2, 0, 0], sizes = [8, 16, 24], strides = [1, 1, 1]} : vector<10x18x24xf32> to vector<8x16x24xf32>
    %141 = vector.extract_strided_slice %96 {offsets = [2, 0, 0], sizes = [1, 1, 24], strides = [1, 1, 1]} : vector<3x3x24xf32> to vector<1x1x24xf32>
    %142 = vector.shape_cast %141 : vector<1x1x24xf32> to vector<24xf32>
    %143 = vector.shape_cast %142 : vector<24xf32> to vector<1x1x24xf32>
    %144 = vector.broadcast %143 : vector<1x1x24xf32> to vector<8x16x24xf32>
    %145 = arith.mulf %140, %144 : vector<8x16x24xf32>
    %146 = arith.addf %139, %145 : vector<8x16x24xf32>
    %147 = vector.extract_strided_slice %95 {offsets = [2, 1, 0], sizes = [8, 16, 24], strides = [1, 1, 1]} : vector<10x18x24xf32> to vector<8x16x24xf32>
    %148 = vector.extract_strided_slice %96 {offsets = [2, 1, 0], sizes = [1, 1, 24], strides = [1, 1, 1]} : vector<3x3x24xf32> to vector<1x1x24xf32>
    %149 = vector.shape_cast %148 : vector<1x1x24xf32> to vector<24xf32>
    %150 = vector.shape_cast %149 : vector<24xf32> to vector<1x1x24xf32>
    %151 = vector.broadcast %150 : vector<1x1x24xf32> to vector<8x16x24xf32>
    %152 = arith.mulf %147, %151 : vector<8x16x24xf32>
    %153 = arith.addf %146, %152 : vector<8x16x24xf32>
    %154 = vector.extract_strided_slice %95 {offsets = [2, 2, 0], sizes = [8, 16, 24], strides = [1, 1, 1]} : vector<10x18x24xf32> to vector<8x16x24xf32>
    %155 = vector.extract_strided_slice %96 {offsets = [2, 2, 0], sizes = [1, 1, 24], strides = [1, 1, 1]} : vector<3x3x24xf32> to vector<1x1x24xf32>
    %156 = vector.shape_cast %155 : vector<1x1x24xf32> to vector<24xf32>
    %157 = vector.shape_cast %156 : vector<24xf32> to vector<1x1x24xf32>
    %158 = vector.broadcast %157 : vector<1x1x24xf32> to vector<8x16x24xf32>
    %159 = arith.mulf %154, %158 : vector<8x16x24xf32>
    %160 = arith.addf %153, %159 : vector<8x16x24xf32>
    %c0_98 = arith.constant 0 : index
    %c0_99 = arith.constant 0 : index
    %c0_100 = arith.constant 0 : index
    %161 = vector.load %arg7[%c0_98, %c0_99, %c0_100] : memref<1x1x24xf32, #tpu.memory_space<vmem>>, vector<1x1x24xf32>
    %162 = vector.broadcast %161 : vector<1x1x24xf32> to vector<8x16x24xf32>
    %163 = arith.mulf %160, %162 : vector<8x16x24xf32>
    %c0_101 = arith.constant 0 : index
    %c0_102 = arith.constant 0 : index
    %c0_103 = arith.constant 0 : index
    %164 = vector.load %arg8[%c0_101, %c0_102, %c0_103] : memref<1x1x24xf32, #tpu.memory_space<vmem>>, vector<1x1x24xf32>
    %165 = vector.broadcast %164 : vector<1x1x24xf32> to vector<8x16x24xf32>
    %166 = arith.addf %163, %165 : vector<8x16x24xf32>
    %cst_104 = arith.constant 0.000000e+00 : f32
    %167 = vector.broadcast %cst_104 : f32 to vector<8x16x24xf32>
    %168 = arith.maximumf %166, %167 : vector<8x16x24xf32>
    %169 = vector.shape_cast %168 : vector<8x16x24xf32> to vector<128x24xf32>
    %c0_105 = arith.constant 0 : index
    %c0_106 = arith.constant 0 : index
    %170 = vector.load %arg9[%c0_105, %c0_106] : memref<24x4xf32, #tpu.memory_space<vmem>>, vector<24x4xf32>
    %cst_107 = arith.constant dense<0.000000e+00> : vector<128x4xf32>
    %171 = tpu.matmul %169, %170, %cst_107 {dimension_numbers = #tpu.dot_dimension_numbers<[1], [0], [0], [1], [0, 0, 1, 1], [], []>} : vector<128x24xf32>, vector<24x4xf32>, vector<128x4xf32> -> vector<128x4xf32>
    %c0_108 = arith.constant 0 : index
    %c0_109 = arith.constant 0 : index
    %172 = vector.load %arg10[%c0_108, %c0_109] : memref<1x4xf32, #tpu.memory_space<vmem>>, vector<1x4xf32>
    %173 = vector.broadcast %172 : vector<1x4xf32> to vector<128x4xf32>
    %174 = arith.mulf %171, %173 : vector<128x4xf32>
    %c0_110 = arith.constant 0 : index
    %c0_111 = arith.constant 0 : index
    %175 = vector.load %arg11[%c0_110, %c0_111] : memref<1x4xf32, #tpu.memory_space<vmem>>, vector<1x4xf32>
    %176 = vector.broadcast %175 : vector<1x4xf32> to vector<128x4xf32>
    %177 = arith.addf %174, %176 : vector<128x4xf32>
    %c8_i32_112 = arith.constant 8 : i32
    %178 = arith.muli %arg1, %c8_i32_112 : i32
    %179 = tpu.assume_multiple %178, 8 : i32
    %c0_113 = arith.constant 0 : index
    %180 = arith.index_cast %179 : i32 to index
    %c0_114 = arith.constant 0 : index
    %c0_115 = arith.constant 0 : index
    %181 = vector.load %arg2[%c0_113, %180, %c0_114, %c0_115] : memref<1x16x16x4xf32, #tpu.memory_space<vmem>>, vector<1x8x16x4xf32>
    %182 = vector.shape_cast %181 : vector<1x8x16x4xf32> to vector<8x16x4xf32>
    %183 = vector.shape_cast %182 : vector<8x16x4xf32> to vector<128x4xf32>
    %184 = arith.addf %177, %183 : vector<128x4xf32>
    %185 = vector.shape_cast %184 : vector<128x4xf32> to vector<8x16x4xf32>
    %c0_116 = arith.constant 0 : index
    %c0_117 = arith.constant 0 : index
    %c0_118 = arith.constant 0 : index
    %c0_119 = arith.constant 0 : index
    %186 = vector.load %arg12[%c0_116, %c0_117, %c0_118, %c0_119] : memref<1x8x16x4xf32, #tpu.memory_space<vmem>>, vector<1x8x16x4xf32>
    %187 = vector.shape_cast %186 : vector<1x8x16x4xf32> to vector<8x16x4xf32>
    %188 = vector.shape_cast %185 : vector<8x16x4xf32> to vector<1x8x16x4xf32>
    tpu.vector_store %arg12[%c0_116, %c0_117, %c0_118, %c0_119], %188 {strides = array<i32>} : memref<1x8x16x4xf32, #tpu.memory_space<vmem>>, vector<1x8x16x4xf32>,
    return
  }
  func.func @transform_0(%arg0: i32, %arg1: i32) -> (i32, i32, i32, i32) {
    %c0_i32 = arith.constant 0 : i32
    %c0_i32_0 = arith.constant 0 : i32
    %c0_i32_1 = arith.constant 0 : i32
    %c0_i32_2 = arith.constant 0 : i32
    return %arg0, %c0_i32, %c0_i32_0, %c0_i32_1 : i32, i32, i32, i32
  }
  func.func @transform_1(%arg0: i32, %arg1: i32) -> (i32, i32) {
    %c0_i32 = arith.constant 0 : i32
    %c0_i32_0 = arith.constant 0 : i32
    %c0_i32_1 = arith.constant 0 : i32
    return %c0_i32, %c0_i32_0 : i32, i32
  }
  func.func @transform_2(%arg0: i32, %arg1: i32) -> (i32, i32) {
    %c0_i32 = arith.constant 0 : i32
    %c0_i32_0 = arith.constant 0 : i32
    %c0_i32_1 = arith.constant 0 : i32
    return %c0_i32, %c0_i32_0 : i32, i32
  }
  func.func @transform_3(%arg0: i32, %arg1: i32) -> (i32, i32) {
    %c0_i32 = arith.constant 0 : i32
    %c0_i32_0 = arith.constant 0 : i32
    %c0_i32_1 = arith.constant 0 : i32
    return %c0_i32, %c0_i32_0 : i32, i32
  }
  func.func @transform_4(%arg0: i32, %arg1: i32) -> (i32, i32, i32) {
    %c0_i32 = arith.constant 0 : i32
    %c0_i32_0 = arith.constant 0 : i32
    %c0_i32_1 = arith.constant 0 : i32
    %c0_i32_2 = arith.constant 0 : i32
    return %c0_i32, %c0_i32_0, %c0_i32_1 : i32, i32, i32
  }
  func.func @transform_5(%arg0: i32, %arg1: i32) -> (i32, i32, i32) {
    %c0_i32 = arith.constant 0 : i32
    %c0_i32_0 = arith.constant 0 : i32
    %c0_i32_1 = arith.constant 0 : i32
    %c0_i32_2 = arith.constant 0 : i32
    return %c0_i32, %c0_i32_0, %c0_i32_1 : i32, i32, i32
  }
  func.func @transform_6(%arg0: i32, %arg1: i32) -> (i32, i32, i32) {
    %c0_i32 = arith.constant 0 : i32
    %c0_i32_0 = arith.constant 0 : i32
    %c0_i32_1 = arith.constant 0 : i32
    %c0_i32_2 = arith.constant 0 : i32
    return %c0_i32, %c0_i32_0, %c0_i32_1 : i32, i32, i32
  }
  func.func @transform_7(%arg0: i32, %arg1: i32) -> (i32, i32) {
    %c0_i32 = arith.constant 0 : i32
    %c0_i32_0 = arith.constant 0 : i32
    %c0_i32_1 = arith.constant 0 : i32
    return %c0_i32, %c0_i32_0 : i32, i32
  }
  func.func @transform_8(%arg0: i32, %arg1: i32) -> (i32, i32) {
    %c0_i32 = arith.constant 0 : i32
    %c0_i32_0 = arith.constant 0 : i32
    %c0_i32_1 = arith.constant 0 : i32
    return %c0_i32, %c0_i32_0 : i32, i32
  }
  func.func @transform_9(%arg0: i32, %arg1: i32) -> (i32, i32) {
    %c0_i32 = arith.constant 0 : i32
    %c0_i32_0 = arith.constant 0 : i32
    %c0_i32_1 = arith.constant 0 : i32
    return %c0_i32, %c0_i32_0 : i32, i32
  }
  func.func @transform_10(%arg0: i32, %arg1: i32) -> (i32, i32, i32, i32) {
    %c0_i32 = arith.constant 0 : i32
    %c0_i32_0 = arith.constant 0 : i32
    %c0_i32_1 = arith.constant 0 : i32
    return %arg0, %arg1, %c0_i32, %c0_i32_0 : i32, i32, i32, i32
  }
}

</mosaic_0001>

<llo_original>
// kernel: tpu_custom_call.1
$region0: #{tpu_custom_call.1}
  #allocation0 [shape = 'u32[]', space=smem, size = 0x4, offset = 0x4, fixed_abs, tag = 'smem constant byte address 0x4 - core index']
  #allocation1 [shape = 'u32[72,128]{1,0:T(1,128)}', space=vmem, size = 0x9000, scoped, tag = 'internal scratch']
  #allocation2 [shape = 'f32[10,16,4]{2,1,0:T(8,128)}', space=vmem, size = 0x14000, scoped, tag = 'scratch operand']
  #allocation3 [shape = 'f32[10,18,24]{2,1,0:T(8,128)}', space=vmem, size = 0x1e000, scoped, tag = 'scratch operand']
  %s0 = inlined_call_operand.vmem [shape: f32[2,16,16,4], index: 0, kind: input, shape index: {}]
  %s1 = inlined_call_operand.vmem [shape: f32[4,24], index: 1, kind: input, shape index: {}]
  %s2 = inlined_call_operand.vmem [shape: f32[1,24], index: 2, kind: input, shape index: {}]
  %s3 = inlined_call_operand.vmem [shape: f32[1,24], index: 3, kind: input, shape index: {}]
  %s4 = inlined_call_operand.vmem [shape: f32[3,3,24], index: 4, kind: input, shape index: {}]
  %s5 = inlined_call_operand.vmem [shape: f32[1,1,24], index: 5, kind: input, shape index: {}]
  %s6 = inlined_call_operand.vmem [shape: f32[1,1,24], index: 6, kind: input, shape index: {}]
  %s7 = inlined_call_operand.vmem [shape: f32[24,4], index: 7, kind: input, shape index: {}]
  %s8 = inlined_call_operand.vmem [shape: f32[1,4], index: 8, kind: input, shape index: {}]
  %s9 = inlined_call_operand.vmem [shape: f32[1,4], index: 9, kind: input, shape index: {}]
  %s10 = inlined_call_operand.vmem [shape: f32[2,16,16,4], index: 10, kind: output, shape index: {}]
  %s11 = sld [smem:[#allocation0]]
  $region81: #{tpu_custom_call.1} parent=0
    _
  %s13 = ssub.s32 1, %s11
  %s14 = scalar_select 0, %s13, %s11
  loop: start=0, step=1, limit=6
  $region2: #{tpu_custom_call.1} parent=0 // loop_pre_header
    _
  $region3: #{tpu_custom_call.1} parent=0 // loop_header
    %s16 = sphi 0, %s20
    %p17 = scmp.ge.s32.totalorder %s16, 6
    %s23 = sphi 0, %s35
    %s24 = sphi 0, %s31
    %s25 = sphi 0, %s23
    %s26 = sphi 0, %s24
    %s27 = sphi 0, %s25
    %s28 = sphi 0, %s26
    %s38 = sphi 0, %s40
    %s41 = sphi 0, %s38
    %s42 = sphi 0, %s41
    %s58 = sphi 0, %s42
    %s62 = sphi 0, %s62
    %s64 = sphi 0, %s62
    %s65 = sphi 0, %s64
    %s79 = sphi 0, %s65
    %s83 = sphi 0, %s83
    %s85 = sphi 0, %s83
    %s86 = sphi 0, %s85
    %s100 = sphi 0, %s86
    %s104 = sphi 0, %s104
    %s106 = sphi 0, %s104
    %s107 = sphi 0, %s106
    %s121 = sphi 0, %s107
    %s125 = sphi 0, %s125
    %s127 = sphi 0, %s125
    %s128 = sphi 0, %s127
    %s142 = sphi 0, %s128
    %s146 = sphi 0, %s146
    %s148 = sphi 0, %s146
    %s149 = sphi 0, %s148
    %s163 = sphi 0, %s149
    %s167 = sphi 0, %s167
    %s169 = sphi 0, %s167
    %s170 = sphi 0, %s169
    %s184 = sphi 0, %s170
    %s188 = sphi 0, %s188
    %s190 = sphi 0, %s188
    %s191 = sphi 0, %s190
    %s205 = sphi 0, %s191
    %s209 = sphi 0, %s209
    %s211 = sphi 0, %s209
    %s212 = sphi 0, %s211
    %s226 = sphi 0, %s212
    %s230 = sphi 0, %s230
    %s232 = sphi 0, %s230
    %s233 = sphi 0, %s232
    %s247 = sphi 0, %s233
    %s255 = sphi 0, %s257
    %s258 = sphi 0, %s255
    %s259 = sphi 0, %s258
    %s275 = sphi 0, %s259
  $region4: #{tpu_custom_call.1} parent=0 // loop_header_branch
    %19 = sbr.rel (%p17) target = $region8
  $region5: #{tpu_custom_call.1} parent=0 // loop_body
    %s21 = ssub.s32 %s16, 1
    %s22 = ssub.s32 %s16, 2
    %s29 = sadd.s32 1, %s24
    %p30 = scmp.ge.s32.totalorder %s29, 2
    %s31 = scalar_select %p30, 0, %s29
    %s32 = sadd.s32 1, %s23
    %s33 = scalar_select %p30, %s32, %s23
    %p34 = scmp.ge.s32.totalorder %s33, 2
    %s35 = scalar_select %p34, 0, %s33
    %s36 = ssub.s32 %s23, %s35
    %p37 = scmp.eq.s32.totalorder %s36, 0
    %s39 = sadd.s32 %s38, 1
    %s40 = scalar_select %p37, %s38, %s39
    %p43 = pneg %p37
    %p44 = scmp.eq.s32.totalorder %s16, 3
    %p45 = por %p43, %p44
    %p46 = scmp.ne.s32.totalorder %s38, %s41
    %p47 = scmp.eq.s32.totalorder %s16, 0
    %p48 = por %p46, %p47
    %p49 = scmp.ne.s32.totalorder %s38, %s41
    %p50 = scmp.eq.s32.totalorder %s21, 3
    %p51 = por %p49, %p50
    %p52 = scmp.ne.s32.totalorder %s41, %s42
    %p53 = scmp.eq.s32.totalorder %s21, 0
    %p54 = por %p52, %p53
    %p55 = scmp.ne.s32.totalorder %s41, %s42
    %p56 = scmp.eq.s32.totalorder %s22, 3
    %p57 = por %p55, %p56
    %p59 = scmp.ne.s32.totalorder %s42, %s58
    %p60 = scmp.eq.s32.totalorder %s22, 0
    %p61 = por %p59, %p60
    %s63 = sadd.s32 %s62, 1
    %p66 = scmp.eq.s32.totalorder %s16, 3
    %p67 = scmp.ne.s32.totalorder %s62, %s64
    %p68 = scmp.eq.s32.totalorder %s16, 0
    %p69 = por %p67, %p68
    %p70 = scmp.ne.s32.totalorder %s62, %s64
    %p71 = scmp.eq.s32.totalorder %s21, 3
    %p72 = por %p70, %p71
    %p73 = scmp.ne.s32.totalorder %s64, %s65
    %p74 = scmp.eq.s32.totalorder %s21, 0
    %p75 = por %p73, %p74
    %p76 = scmp.ne.s32.totalorder %s64, %s65
    %p77 = scmp.eq.s32.totalorder %s22, 3
    %p78 = por %p76, %p77
    %p80 = scmp.ne.s32.totalorder %s65, %s79
    %p81 = scmp.eq.s32.totalorder %s22, 0
    %p82 = por %p80, %p81
    %s84 = sadd.s32 %s83, 1
    %p87 = scmp.eq.s32.totalorder %s16, 3
    %p88 = scmp.ne.s32.totalorder %s83, %s85
    %p89 = scmp.eq.s32.totalorder %s16, 0
    %p90 = por %p88, %p89
    %p91 = scmp.ne.s32.totalorder %s83, %s85
    %p92 = scmp.eq.s32.totalorder %s21, 3
    %p93 = por %p91, %p92
    %p94 = scmp.ne.s32.totalorder %s85, %s86
    %p95 = scmp.eq.s32.totalorder %s21, 0
    %p96 = por %p94, %p95
    %p97 = scmp.ne.s32.totalorder %s85, %s86
    %p98 = scmp.eq.s32.totalorder %s22, 3
    %p99 = por %p97, %p98
    %p101 = scmp.ne.s32.totalorder %s86, %s100
    %p102 = scmp.eq.s32.totalorder %s22, 0
    %p103 = por %p101, %p102
    %s105 = sadd.s32 %s104, 1
    %p108 = scmp.eq.s32.totalorder %s16, 3
    %p109 = scmp.ne.s32.totalorder %s104, %s106
    %p110 = scmp.eq.s32.totalorder %s16, 0
    %p111 = por %p109, %p110
    %p112 = scmp.ne.s32.totalorder %s104, %s106
    %p113 = scmp.eq.s32.totalorder %s21, 3
    %p114 = por %p112, %p113
    %p115 = scmp.ne.s32.totalorder %s106, %s107
    %p116 = scmp.eq.s32.totalorder %s21, 0
    %p117 = por %p115, %p116
    %p118 = scmp.ne.s32.totalorder %s106, %s107
    %p119 = scmp.eq.s32.totalorder %s22, 3
    %p120 = por %p118, %p119
    %p122 = scmp.ne.s32.totalorder %s107, %s121
    %p123 = scmp.eq.s32.totalorder %s22, 0
    %p124 = por %p122, %p123
    %s126 = sadd.s32 %s125, 1
    %p129 = scmp.eq.s32.totalorder %s16, 3
    %p130 = scmp.ne.s32.totalorder %s125, %s127
    %p131 = scmp.eq.s32.totalorder %s16, 0
    %p132 = por %p130, %p131
    %p133 = scmp.ne.s32.totalorder %s125, %s127
    %p134 = scmp.eq.s32.totalorder %s21, 3
    %p135 = por %p133, %p134
    %p136 = scmp.ne.s32.totalorder %s127, %s128
    %p137 = scmp.eq.s32.totalorder %s21, 0
    %p138 = por %p136, %p137
    %p139 = scmp.ne.s32.totalorder %s127, %s128
    %p140 = scmp.eq.s32.totalorder %s22, 3
    %p141 = por %p139, %p140
    %p143 = scmp.ne.s32.totalorder %s128, %s142
    %p144 = scmp.eq.s32.totalorder %s22, 0
    %p145 = por %p143, %p144
    %s147 = sadd.s32 %s146, 1
    %p150 = scmp.eq.s32.totalorder %s16, 3
    %p151 = scmp.ne.s32.totalorder %s146, %s148
    %p152 = scmp.eq.s32.totalorder %s16, 0
    %p153 = por %p151, %p152
    %p154 = scmp.ne.s32.totalorder %s146, %s148
    %p155 = scmp.eq.s32.totalorder %s21, 3
    %p156 = por %p154, %p155
    %p157 = scmp.ne.s32.totalorder %s148, %s149
    %p158 = scmp.eq.s32.totalorder %s21, 0
    %p159 = por %p157, %p158
    %p160 = scmp.ne.s32.totalorder %s148, %s149
    %p161 = scmp.eq.s32.totalorder %s22, 3
    %p162 = por %p160, %p161
    %p164 = scmp.ne.s32.totalorder %s149, %s163
    %p165 = scmp.eq.s32.totalorder %s22, 0
    %p166 = por %p164, %p165
    %s168 = sadd.s32 %s167, 1
    %p171 = scmp.eq.s32.totalorder %s16, 3
    %p172 = scmp.ne.s32.totalorder %s167, %s169
    %p173 = scmp.eq.s32.totalorder %s16, 0
    %p174 = por %p172, %p173
    %p175 = scmp.ne.s32.totalorder %s167, %s169
    %p176 = scmp.eq.s32.totalorder %s21, 3
    %p177 = por %p175, %p176
    %p178 = scmp.ne.s32.totalorder %s169, %s170
    %p179 = scmp.eq.s32.totalorder %s21, 0
    %p180 = por %p178, %p179
    %p181 = scmp.ne.s32.totalorder %s169, %s170
    %p182 = scmp.eq.s32.totalorder %s22, 3
    %p183 = por %p181, %p182
    %p185 = scmp.ne.s32.totalorder %s170, %s184
    %p186 = scmp.eq.s32.totalorder %s22, 0
    %p187 = por %p185, %p186
    %s189 = sadd.s32 %s188, 1
    %p192 = scmp.eq.s32.totalorder %s16, 3
    %p193 = scmp.ne.s32.totalorder %s188, %s190
    %p194 = scmp.eq.s32.totalorder %s16, 0
    %p195 = por %p193, %p194
    %p196 = scmp.ne.s32.totalorder %s188, %s190
    %p197 = scmp.eq.s32.totalorder %s21, 3
    %p198 = por %p196, %p197
    %p199 = scmp.ne.s32.totalorder %s190, %s191
    %p200 = scmp.eq.s32.totalorder %s21, 0
    %p201 = por %p199, %p200
    %p202 = scmp.ne.s32.totalorder %s190, %s191
    %p203 = scmp.eq.s32.totalorder %s22, 3
    %p204 = por %p202, %p203
    %p206 = scmp.ne.s32.totalorder %s191, %s205
    %p207 = scmp.eq.s32.totalorder %s22, 0
    %p208 = por %p206, %p207
    %s210 = sadd.s32 %s209, 1
    %p213 = scmp.eq.s32.totalorder %s16, 3
    %p214 = scmp.ne.s32.totalorder %s209, %s211
    %p215 = scmp.eq.s32.totalorder %s16, 0
    %p216 = por %p214, %p215
    %p217 = scmp.ne.s32.totalorder %s209, %s211
    %p218 = scmp.eq.s32.totalorder %s21, 3
    %p219 = por %p217, %p218
    %p220 = scmp.ne.s32.totalorder %s211, %s212
    %p221 = scmp.eq.s32.totalorder %s21, 0
    %p222 = por %p220, %p221
    %p223 = scmp.ne.s32.totalorder %s211, %s212
    %p224 = scmp.eq.s32.totalorder %s22, 3
    %p225 = por %p223, %p224
    %p227 = scmp.ne.s32.totalorder %s212, %s226
    %p228 = scmp.eq.s32.totalorder %s22, 0
    %p229 = por %p227, %p228
    %s231 = sadd.s32 %s230, 1
    %p234 = scmp.eq.s32.totalorder %s16, 3
    %p235 = scmp.ne.s32.totalorder %s230, %s232
    %p236 = scmp.eq.s32.totalorder %s16, 0
    %p237 = por %p235, %p236
    %p238 = scmp.ne.s32.totalorder %s230, %s232
    %p239 = scmp.eq.s32.totalorder %s21, 3
    %p240 = por %p238, %p239
    %p241 = scmp.ne.s32.totalorder %s232, %s233
    %p242 = scmp.eq.s32.totalorder %s21, 0
    %p243 = por %p241, %p242
    %p244 = scmp.ne.s32.totalorder %s232, %s233
    %p245 = scmp.eq.s32.totalorder %s22, 3
    %p246 = por %p244, %p245
    %p248 = scmp.ne.s32.totalorder %s233, %s247
    %p249 = scmp.eq.s32.totalorder %s22, 0
    %p250 = por %p248, %p249
    %s251 = ssub.s32 %s23, %s35
    %s252 = ssub.s32 %s24, %s31
    %s253 = sor.u32 %s251, %s252
    %p254 = scmp.eq.s32.totalorder %s253, 0
    %s256 = sadd.s32 %s255, 1
    %s257 = scalar_select %p254, %s255, %s256
    %p260 = pneg %p254
    %p261 = scmp.eq.s32.totalorder %s16, 3
    %p262 = por %p260, %p261
    %p263 = scmp.ne.s32.totalorder %s255, %s258
    %p264 = scmp.eq.s32.totalorder %s16, 0
    %p265 = por %p263, %p264
    %p266 = scmp.ne.s32.totalorder %s255, %s258
    %p267 = scmp.eq.s32.totalorder %s21, 3
    %p268 = por %p266, %p267
    %p269 = scmp.ne.s32.totalorder %s258, %s259
    %p270 = scmp.eq.s32.totalorder %s21, 0
    %p271 = por %p269, %p270
    %p272 = scmp.ne.s32.totalorder %s258, %s259
    %p273 = scmp.eq.s32.totalorder %s22, 3
    %p274 = por %p272, %p273
    %p276 = scmp.ne.s32.totalorder %s259, %s275
    %p277 = scmp.eq.s32.totalorder %s22, 0
    %p278 = por %p276, %p277
    %p279 = scmp.le.s32.totalorder 1, %s16
    %p280 = scmp.lt.s32.totalorder %s16, 5
    %p281 = pnand %p279, %p280
    %p282 = pneg %p281
    // Predicated region
    $region9: #{tpu_custom_call.1} parent=5 // pred_check
      _
    $region10: #{tpu_custom_call.1} parent=5 // pred_check_branch
      %284 = sbr.rel (%p281) target = $region12
    $region11: #{tpu_custom_call.1} parent=5 // pred_region
      %s285 = ssub.s32 %s16, 1
      // Predicated region
      $region13: #{tpu_custom_call.1} parent=11 // pred_check
        %p286 = pneg %p75
      $region14: #{tpu_custom_call.1} parent=11 // pred_check_branch
        %288 = sbr.rel (%p286) target = $region16
      $region15: #{tpu_custom_call.1} parent=11 // pred_region
        _
      $region16: #{tpu_custom_call.1} parent=11 // pred_fallthru
        _
      // Predicated region
      $region17: #{tpu_custom_call.1} parent=11 // pred_check
        %p289 = pneg %p96
      $region18: #{tpu_custom_call.1} parent=11 // pred_check_branch
        %291 = sbr.rel (%p289) target = $region20
      $region19: #{tpu_custom_call.1} parent=11 // pred_region
        _
      $region20: #{tpu_custom_call.1} parent=11 // pred_fallthru
        _
      // Predicated region
      $region21: #{tpu_custom_call.1} parent=11 // pred_check
        %p292 = pneg %p117
      $region22: #{tpu_custom_call.1} parent=11 // pred_check_branch
        %294 = sbr.rel (%p292) target = $region24
      $region23: #{tpu_custom_call.1} parent=11 // pred_region
        _
      $region24: #{tpu_custom_call.1} parent=11 // pred_fallthru
        _
      // Predicated region
      $region25: #{tpu_custom_call.1} parent=11 // pred_check
        %p295 = pneg %p138
      $region26: #{tpu_custom_call.1} parent=11 // pred_check_branch
        %297 = sbr.rel (%p295) target = $region28
      $region27: #{tpu_custom_call.1} parent=11 // pred_region
        _
      $region28: #{tpu_custom_call.1} parent=11 // pred_fallthru
        _
      // Predicated region
      $region29: #{tpu_custom_call.1} parent=11 // pred_check
        %p298 = pneg %p159
      $region30: #{tpu_custom_call.1} parent=11 // pred_check_branch
        %300 = sbr.rel (%p298) target = $region32
      $region31: #{tpu_custom_call.1} parent=11 // pred_region
        _
      $region32: #{tpu_custom_call.1} parent=11 // pred_fallthru
        _
      // Predicated region
      $region33: #{tpu_custom_call.1} parent=11 // pred_check
        %p301 = pneg %p180
      $region34: #{tpu_custom_call.1} parent=11 // pred_check_branch
        %303 = sbr.rel (%p301) target = $region36
      $region35: #{tpu_custom_call.1} parent=11 // pred_region
        _
      $region36: #{tpu_custom_call.1} parent=11 // pred_fallthru
        _
      // Predicated region
      $region37: #{tpu_custom_call.1} parent=11 // pred_check
        %p304 = pneg %p201
      $region38: #{tpu_custom_call.1} parent=11 // pred_check_branch
        %306 = sbr.rel (%p304) target = $region40
      $region39: #{tpu_custom_call.1} parent=11 // pred_region
        _
      $region40: #{tpu_custom_call.1} parent=11 // pred_fallthru
        _
      // Predicated region
      $region41: #{tpu_custom_call.1} parent=11 // pred_check
        %p307 = pneg %p222
      $region42: #{tpu_custom_call.1} parent=11 // pred_check_branch
        %309 = sbr.rel (%p307) target = $region44
      $region43: #{tpu_custom_call.1} parent=11 // pred_region
        _
      $region44: #{tpu_custom_call.1} parent=11 // pred_fallthru
        _
      // Predicated region
      $region45: #{tpu_custom_call.1} parent=11 // pred_check
        %p310 = pneg %p243
      $region46: #{tpu_custom_call.1} parent=11 // pred_check_branch
        %312 = sbr.rel (%p310) target = $region48
      $region47: #{tpu_custom_call.1} parent=11 // pred_region
        _
      $region48: #{tpu_custom_call.1} parent=11 // pred_fallthru
        _
    $region12: #{tpu_custom_call.1} parent=5 // pred_fallthru
      _
    %p313 = scmp.lt.s32.totalorder %s16, 4
    // Predicated region
    $region49: #{tpu_custom_call.1} parent=5 // pred_check
      %p314 = pneg %p313
    $region50: #{tpu_custom_call.1} parent=5 // pred_check_branch
      %316 = sbr.rel (%p314) target = $region52
    $region51: #{tpu_custom_call.1} parent=5 // pred_region
      // Predicated region
      $region53: #{tpu_custom_call.1} parent=51 // pred_check
        %p317 = pneg %p48
      $region54: #{tpu_custom_call.1} parent=51 // pred_check_branch
        %319 = sbr.rel (%p317) target = $region56
      $region55: #{tpu_custom_call.1} parent=51 // pred_region
        %p320 = scmp.lt.s32.totalorder %s23, 1
        %s321 = scalar_select %p320, %s23, 1
        %s322 = smul.addr %s321, 32
        %s323 = smul.addr %s322, 8
        %s324 = scalar_lea.vmem %s0, %s323
      $region56: #{tpu_custom_call.1} parent=51 // pred_fallthru
        _
    $region52: #{tpu_custom_call.1} parent=5 // pred_fallthru
      _
    %p325 = scmp.le.s32.totalorder 1, %s16
    %p326 = scmp.lt.s32.totalorder %s16, 5
    %p327 = pnand %p325, %p326
    %p328 = pneg %p327
    // Predicated region
    $region57: #{tpu_custom_call.1} parent=5 // pred_check
      _
    $region58: #{tpu_custom_call.1} parent=5 // pred_check_branch
      %330 = sbr.rel (%p327) target = $region60
    $region59: #{tpu_custom_call.1} parent=5 // pred_region
      %s331 = ssub.s32 %s16, 1
      %p332 = scmp.lt.s32.totalorder %s25, 1
      %s333 = scalar_select %p332, %s25, 1
      %s334 = smul.addr %s333, 32
      %s335 = smul.addr %s334, 8
      %s336 = scalar_lea.vmem %s0, %s335
      %p337 = pneg %p54
      %p338 = pneg %p51
      %p339 = pneg %p75
      %p340 = pneg %p72
      %p341 = pneg %p96
      %p342 = pneg %p93
      %p343 = pneg %p117
      %p344 = pneg %p114
      %p345 = pneg %p138
      %p346 = pneg %p135
      %p347 = pneg %p159
      %p348 = pneg %p156
      %p349 = pneg %p180
      %p350 = pneg %p177
      %p351 = pneg %p201
      %p352 = pneg %p198
      %p353 = pneg %p222
      %p354 = pneg %p219
      %p355 = pneg %p243
      %p356 = pneg %p240
      %p357 = pneg %p271
      %p358 = pneg %p268
      %s359 = smul.u32 8, %s26
      %p360 = scmp.lt.s32.totalorder %s25, 1
      %s361 = scalar_select %p360, %s25, 1
      %p362 = scmp.lt.s32.totalorder %s359, 15
      %s363 = scalar_select %p362, %s359, 15
      %s364 = smul.addr %s363, 2
      %s365 = smul.addr %s361, 32
      %s366 = sadd.s32 %s364, %s365
      %s367 = smul.addr %s366, 8
      %s368 = scalar_lea.vmem %s10, %s367
      %p369 = scmp.lt.s32.totalorder %s25, 1
      %s370 = scalar_select %p369, %s25, 1
      %s371 = smul.addr %s370, 32
      %s372 = smul.addr %s371, 8
      %s373 = scalar_lea.vmem %s0, %s372
      %s374 = smul.u32 8, %s26
      %p375 = scmp.lt.s32.totalorder %s25, 1
      %s376 = scalar_select %p375, %s25, 1
      %p377 = scmp.lt.s32.totalorder %s374, 15
      %s378 = scalar_select %p377, %s374, 15
      %s379 = smul.addr %s378, 2
      %s380 = smul.addr %s376, 32
      %s381 = sadd.s32 %s379, %s380
      %s382 = smul.addr %s381, 8
      %s383 = scalar_lea.vmem %s10, %s382
      %s384 = smul.u32 8, %s26
      %s385 = smul.u32 %s26, 8
      %s386 = ssub.s32 %s385, 1
      %p387 = scmp.gt.s32.totalorder %s386, 0
      %s388 = scalar_select %p387, %s386, 0
      %p389 = scmp.lt.s32.totalorder %s388, 15
      %s390 = scalar_select %p389, %s388, 15
      %s391 = smul.u32 %s390, 16
      %s392 = scalar_lea.vmem %s373, %s391
      %v393 = vld [vmem:[%s392] sm:$0xff]
      %v394 = vld [vmem:[%s392 + $0x8] sm:$0xff]
      %vm395 = vcmask 31744
      %396 = vst.msk [vmem:[#allocation2] sm:$0xff] %vm395, %v393
      %397 = vst.msk [vmem:[#allocation2 + $0x8] sm:$0xff] %vm395, %v394
      %p398 = scmp.gt.s32.totalorder %s385, 0
      %s399 = scalar_select %p398, %s385, 0
      %p400 = scmp.lt.s32.totalorder %s399, 15
      %s401 = scalar_select %p400, %s399, 15
      %s402 = smul.u32 %s401, 16
      %s403 = scalar_lea.vmem %s373, %s402
      %v404 = vld [vmem:[%s403] sm:$0xff]
      %v405 = vld [vmem:[%s403 + $0x8] sm:$0xff]
      %s406 = scalar_lea.vmem [#allocation2], 16
      %407 = vst.msk [vmem:[%s406] sm:$0xff] %vm395, %v404
      %408 = vst.msk [vmem:[%s406 + $0x8] sm:$0xff] %vm395, %v405
      %s409 = sadd.s32 %s385, 1
      %p410 = scmp.gt.s32.totalorder %s409, 0
      %s411 = scalar_select %p410, %s409, 0
      %p412 = scmp.lt.s32.totalorder %s411, 15
      %s413 = scalar_select %p412, %s411, 15
      %s414 = smul.u32 %s413, 16
      %s415 = scalar_lea.vmem %s373, %s414
      %v416 = vld [vmem:[%s415] sm:$0xff]
      %v417 = vld [vmem:[%s415 + $0x8] sm:$0xff]
      %s418 = scalar_lea.vmem [#allocation2], 32
      %419 = vst.msk [vmem:[%s418] sm:$0xff] %vm395, %v416
      %420 = vst.msk [vmem:[%s418 + $0x8] sm:$0xff] %vm395, %v417
      %s421 = sadd.s32 %s385, 2
      %p422 = scmp.gt.s32.totalorder %s421, 0
      %s423 = scalar_select %p422, %s421, 0
      %p424 = scmp.lt.s32.totalorder %s423, 15
      %s425 = scalar_select %p424, %s423, 15
      %s426 = smul.u32 %s425, 16
      %s427 = scalar_lea.vmem %s373, %s426
      %v428 = vld [vmem:[%s427] sm:$0xff]
      %v429 = vld [vmem:[%s427 + $0x8] sm:$0xff]
      %s430 = scalar_lea.vmem [#allocation2], 48
      %431 = vst.msk [vmem:[%s430] sm:$0xff] %vm395, %v428
      %432 = vst.msk [vmem:[%s430 + $0x8] sm:$0xff] %vm395, %v429
      %s433 = sadd.s32 %s385, 3
      %p434 = scmp.gt.s32.totalorder %s433, 0
      %s435 = scalar_select %p434, %s433, 0
      %p436 = scmp.lt.s32.totalorder %s435, 15
      %s437 = scalar_select %p436, %s435, 15
      %s438 = smul.u32 %s437, 16
      %s439 = scalar_lea.vmem %s373, %s438
      %v440 = vld [vmem:[%s439] sm:$0xff]
      %v441 = vld [vmem:[%s439 + $0x8] sm:$0xff]
      %s442 = scalar_lea.vmem [#allocation2], 64
      %443 = vst.msk [vmem:[%s442] sm:$0xff] %vm395, %v440
      %444 = vst.msk [vmem:[%s442 + $0x8] sm:$0xff] %vm395, %v441
      %s445 = sadd.s32 %s385, 4
      %p446 = scmp.gt.s32.totalorder %s445, 0
      %s447 = scalar_select %p446, %s445, 0
      %p448 = scmp.lt.s32.totalorder %s447, 15
      %s449 = scalar_select %p448, %s447, 15
      %s450 = smul.u32 %s449, 16
      %s451 = scalar_lea.vmem %s373, %s450
      %v452 = vld [vmem:[%s451] sm:$0xff]
      %v453 = vld [vmem:[%s451 + $0x8] sm:$0xff]
      %s454 = scalar_lea.vmem [#allocation2], 80
      %455 = vst.msk [vmem:[%s454] sm:$0xff] %vm395, %v452
      %456 = vst.msk [vmem:[%s454 + $0x8] sm:$0xff] %vm395, %v453
      %s457 = sadd.s32 %s385, 5
      %p458 = scmp.gt.s32.totalorder %s457, 0
      %s459 = scalar_select %p458, %s457, 0
      %p460 = scmp.lt.s32.totalorder %s459, 15
      %s461 = scalar_select %p460, %s459, 15
      %s462 = smul.u32 %s461, 16
      %s463 = scalar_lea.vmem %s373, %s462
      %v464 = vld [vmem:[%s463] sm:$0xff]
      %v465 = vld [vmem:[%s463 + $0x8] sm:$0xff]
      %s466 = scalar_lea.vmem [#allocation2], 96
      %467 = vst.msk [vmem:[%s466] sm:$0xff] %vm395, %v464
      %468 = vst.msk [vmem:[%s466 + $0x8] sm:$0xff] %vm395, %v465
      %s469 = sadd.s32 %s385, 6
      %p470 = scmp.gt.s32.totalorder %s469, 0
      %s471 = scalar_select %p470, %s469, 0
      %p472 = scmp.lt.s32.totalorder %s471, 15
      %s473 = scalar_select %p472, %s471, 15
      %s474 = smul.u32 %s473, 16
      %s475 = scalar_lea.vmem %s373, %s474
      %v476 = vld [vmem:[%s475] sm:$0xff]
      %v477 = vld [vmem:[%s475 + $0x8] sm:$0xff]
      %s478 = scalar_lea.vmem [#allocation2], 112
      %479 = vst.msk [vmem:[%s478] sm:$0xff] %vm395, %v476
      %480 = vst.msk [vmem:[%s478 + $0x8] sm:$0xff] %vm395, %v477
      %s481 = sadd.s32 %s385, 7
      %p482 = scmp.gt.s32.totalorder %s481, 0
      %s483 = scalar_select %p482, %s481, 0
      %p484 = scmp.lt.s32.totalorder %s483, 15
      %s485 = scalar_select %p484, %s483, 15
      %s486 = smul.u32 %s485, 16
      %s487 = scalar_lea.vmem %s373, %s486
      %v488 = vld [vmem:[%s487] sm:$0xff]
      %v489 = vld [vmem:[%s487 + $0x8] sm:$0xff]
      %s490 = scalar_lea.vmem [#allocation2], 128
      %491 = vst.msk [vmem:[%s490] sm:$0xff] %vm395, %v488
      %492 = vst.msk [vmem:[%s490 + $0x8] sm:$0xff] %vm395, %v489
      %s493 = sadd.s32 %s385, 8
      %p494 = scmp.gt.s32.totalorder %s493, 0
      %s495 = scalar_select %p494, %s493, 0
      %p496 = scmp.lt.s32.totalorder %s495, 15
      %s497 = scalar_select %p496, %s495, 15
      %s498 = smul.u32 %s497, 16
      %s499 = scalar_lea.vmem %s373, %s498
      %v500 = vld [vmem:[%s499] sm:$0xff]
      %v501 = vld [vmem:[%s499 + $0x8] sm:$0xff]
      %s502 = scalar_lea.vmem [#allocation2], 144
      %503 = vst.msk [vmem:[%s502] sm:$0xff] %vm395, %v500
      %504 = vst.msk [vmem:[%s502 + $0x8] sm:$0xff] %vm395, %v501
      %v505 = vld [vmem:[#allocation2] sm:$0xff]
      %v506 = vld [vmem:[#allocation2 + $0x8] sm:$0xff]
      %v507 = vld [vmem:[#allocation2 + $0x10] sm:$0xff]
      %v508 = vld [vmem:[#allocation2 + $0x18] sm:$0xff]
      %v509 = vld [vmem:[#allocation2 + $0x20] sm:$0xff]
      %v510 = vld [vmem:[#allocation2 + $0x28] sm:$0xff]
      %v511 = vld [vmem:[#allocation2 + $0x30] sm:$0xff]
      %v512 = vld [vmem:[#allocation2 + $0x38] sm:$0xff]
      %v513 = vld [vmem:[#allocation2 + $0x40] sm:$0xff]
      %v514 = vld [vmem:[#allocation2 + $0x48] sm:$0xff]
      %v515 = vld [vmem:[#allocation2 + $0x50] sm:$0xff]
      %v516 = vld [vmem:[#allocation2 + $0x58] sm:$0xff]
      %v517 = vld [vmem:[#allocation2 + $0x60] sm:$0xff]
      %v518 = vld [vmem:[#allocation2 + $0x68] sm:$0xff]
      %v519 = vld [vmem:[#allocation2 + $0x70] sm:$0xff]
      %v520 = vld [vmem:[#allocation2 + $0x78] sm:$0xff]
      %v521 = vld [vmem:[#allocation2 + $0x80] sm:$0xff]
      %v522 = vld [vmem:[#allocation2 + $0x88] sm:$0xff]
      %v523 = vld [vmem:[#allocation2 + $0x90] sm:$0xff]
      %v524 = vld [vmem:[#allocation2 + $0x98] sm:$0xff]
      %v525 = vld [vmem:[%s1] sm:$0xf]
      %v527 = vsel %vm395, %v505, 0
      %v530 = vsel %vm395, %v506, 0
      %v533 = vsel %vm395, %v507, 0
      %v536 = vsel %vm395, %v508, 0
      %v539 = vsel %vm395, %v509, 0
      %v542 = vsel %vm395, %v510, 0
      %v545 = vsel %vm395, %v511, 0
      %v548 = vsel %vm395, %v512, 0
      %v551 = vsel %vm395, %v513, 0
      %v554 = vsel %vm395, %v514, 0
      %v557 = vsel %vm395, %v515, 0
      %v560 = vsel %vm395, %v516, 0
      %v563 = vsel %vm395, %v517, 0
      %v566 = vsel %vm395, %v518, 0
      %v569 = vsel %vm395, %v519, 0
      %v572 = vsel %vm395, %v520, 0
      %v575 = vsel %vm395, %v521, 0
      %v578 = vsel %vm395, %v522, 0
      %v581 = vsel %vm395, %v523, 0
      %v584 = vsel %vm395, %v524, 0
      %vm586 = vcmask 1043456
      %v588 = vsel %vm586, %v525, 0
      %590 = vmatpush.msra.mxu0 0.0
      %591 = vmatpush.msra.mxu0 0.0
      %592 = vmatpush.msra.mxu0 0.0
      %593 = vmatpush.msra.mxu0 0.0
      %594 = vmatpush.msra.mxu0 0.0
      %595 = vmatpush.msra.mxu0 0.0
      %596 = vmatpush.msra.mxu0 0.0
      %597 = vmatpush.msra.mxu0 0.0
      %598 = vmatpush.msra.mxu0 0.0
      %599 = vmatpush.msra.mxu0 0.0
      %600 = vmatpush.msra.mxu0 0.0
      %601 = vmatpush.msra.mxu0 0.0
      %602 = vmatpush.msra.mxu0 0.0
      %603 = vmatpush.msra.mxu0 0.0
      %604 = vmatpush.msra.mxu0 0.0
      %605 = vmatpush.msra.mxu0 %v588
      %606 = vmatmul.f32.gmra.mxu0 %v527
      %v607 = vpop.f32.mrf.mxu0
      %v608 = vadd.f32 0.0, %v607
      %609 = vmatmul.f32.gmra.mxu0 %v530
      %v610 = vpop.f32.mrf.mxu0
      %v611 = vadd.f32 0.0, %v610
      %612 = vmatmul.f32.gmra.mxu0 %v533
      %v613 = vpop.f32.mrf.mxu0
      %v614 = vadd.f32 0.0, %v613
      %615 = vmatmul.f32.gmra.mxu0 %v536
      %v616 = vpop.f32.mrf.mxu0
      %v617 = vadd.f32 0.0, %v616
      %618 = vmatmul.f32.gmra.mxu0 %v539
      %v619 = vpop.f32.mrf.mxu0
      %v620 = vadd.f32 0.0, %v619
      %621 = vmatmul.f32.gmra.mxu0 %v542
      %v622 = vpop.f32.mrf.mxu0
      %v623 = vadd.f32 0.0, %v622
      %624 = vmatmul.f32.gmra.mxu0 %v545
      %v625 = vpop.f32.mrf.mxu0
      %v626 = vadd.f32 0.0, %v625
      %627 = vmatmul.f32.gmra.mxu0 %v548
      %v628 = vpop.f32.mrf.mxu0
      %v629 = vadd.f32 0.0, %v628
      %630 = vmatmul.f32.gmra.mxu0 %v551
      %v631 = vpop.f32.mrf.mxu0
      %v632 = vadd.f32 0.0, %v631
      %633 = vmatmul.f32.gmra.mxu0 %v554
      %v634 = vpop.f32.mrf.mxu0
      %v635 = vadd.f32 0.0, %v634
      %636 = vmatmul.f32.gmra.mxu0 %v557
      %v637 = vpop.f32.mrf.mxu0
      %v638 = vadd.f32 0.0, %v637
      %639 = vmatmul.f32.gmra.mxu0 %v560
      %v640 = vpop.f32.mrf.mxu0
      %v641 = vadd.f32 0.0, %v640
      %642 = vmatmul.f32.gmra.mxu0 %v563
      %v643 = vpop.f32.mrf.mxu0
      %v644 = vadd.f32 0.0, %v643
      %645 = vmatmul.f32.gmra.mxu0 %v566
      %v646 = vpop.f32.mrf.mxu0
      %v647 = vadd.f32 0.0, %v646
      %648 = vmatmul.f32.gmra.mxu0 %v569
      %v649 = vpop.f32.mrf.mxu0
      %v650 = vadd.f32 0.0, %v649
      %651 = vmatmul.f32.gmra.mxu0 %v572
      %v652 = vpop.f32.mrf.mxu0
      %v653 = vadd.f32 0.0, %v652
      %654 = vmatmul.f32.gmra.mxu0 %v575
      %v655 = vpop.f32.mrf.mxu0
      %v656 = vadd.f32 0.0, %v655
      %657 = vmatmul.f32.gmra.mxu0 %v578
      %v658 = vpop.f32.mrf.mxu0
      %v659 = vadd.f32 0.0, %v658
      %660 = vmatmul.f32.gmra.mxu0 %v581
      %v661 = vpop.f32.mrf.mxu0
      %v662 = vadd.f32 0.0, %v661
      %663 = vmatmul.f32.gmra.mxu0 %v584
      %v664 = vpop.f32.mrf.mxu0
      %v665 = vadd.f32 0.0, %v664
      %666 = vdwg.mxu0
      %v667 = vld [vmem:[%s2] sm:$0x1]
      %v669 = vperm.slane %v667, 0
      %v671 = vmul.f32 %v608, %v669
      %v672 = vmul.f32 %v611, %v669
      %v673 = vmul.f32 %v614, %v669
      %v674 = vmul.f32 %v617, %v669
      %v675 = vmul.f32 %v620, %v669
      %v676 = vmul.f32 %v623, %v669
      %v677 = vmul.f32 %v626, %v669
      %v678 = vmul.f32 %v629, %v669
      %v679 = vmul.f32 %v632, %v669
      %v680 = vmul.f32 %v635, %v669
      %v681 = vmul.f32 %v638, %v669
      %v682 = vmul.f32 %v641, %v669
      %v683 = vmul.f32 %v644, %v669
      %v684 = vmul.f32 %v647, %v669
      %v685 = vmul.f32 %v650, %v669
      %v686 = vmul.f32 %v653, %v669
      %v687 = vmul.f32 %v656, %v669
      %v688 = vmul.f32 %v659, %v669
      %v689 = vmul.f32 %v662, %v669
      %v690 = vmul.f32 %v665, %v669
      %v691 = vld [vmem:[%s3] sm:$0x1]
      %v693 = vperm.slane %v691, 0
      %v695 = vadd.f32 %v671, %v693
      %v696 = vadd.f32 %v672, %v693
      %v697 = vadd.f32 %v673, %v693
      %v698 = vadd.f32 %v674, %v693
      %v699 = vadd.f32 %v675, %v693
      %v700 = vadd.f32 %v676, %v693
      %v701 = vadd.f32 %v677, %v693
      %v702 = vadd.f32 %v678, %v693
      %v703 = vadd.f32 %v679, %v693
      %v704 = vadd.f32 %v680, %v693
      %v705 = vadd.f32 %v681, %v693
      %v706 = vadd.f32 %v682, %v693
      %v707 = vadd.f32 %v683, %v693
      %v708 = vadd.f32 %v684, %v693
      %v709 = vadd.f32 %v685, %v693
      %v710 = vadd.f32 %v686, %v693
      %v711 = vadd.f32 %v687, %v693
      %v712 = vadd.f32 %v688, %v693
      %v713 = vadd.f32 %v689, %v693
      %v714 = vadd.f32 %v690, %v693
      %v715 = vmax.f32 %v695, 0.0
      %v716 = vmax.f32 %v696, 0.0
      %v717 = vmax.f32 %v697, 0.0
      %v718 = vmax.f32 %v698, 0.0
      %v719 = vmax.f32 %v699, 0.0
      %v720 = vmax.f32 %v700, 0.0
      %v721 = vmax.f32 %v701, 0.0
      %v722 = vmax.f32 %v702, 0.0
      %v723 = vmax.f32 %v703, 0.0
      %v724 = vmax.f32 %v704, 0.0
      %v725 = vmax.f32 %v705, 0.0
      %v726 = vmax.f32 %v706, 0.0
      %v727 = vmax.f32 %v707, 0.0
      %v728 = vmax.f32 %v708, 0.0
      %v729 = vmax.f32 %v709, 0.0
      %v730 = vmax.f32 %v710, 0.0
      %v731 = vmax.f32 %v711, 0.0
      %v732 = vmax.f32 %v712, 0.0
      %v733 = vmax.f32 %v713, 0.0
      %v734 = vmax.f32 %v714, 0.0
      %vm735 = vcmask 195584
      %736 = vst.msk [vmem:[#allocation3] sm:$0xff] %vm735, 0.0
      %737 = vst.msk [vmem:[#allocation3 + $0x8] sm:$0xff] %vm735, 0.0
      %vm738 = vcmask 189440
      %739 = vst.msk [vmem:[#allocation3 + $0x10] sm:$0x3] %vm738, 0.0
      %740 = vst.msk [vmem:[#allocation3 + $0x18] sm:$0xff] %vm735, 0.0
      %741 = vst.msk [vmem:[#allocation3 + $0x20] sm:$0xff] %vm735, 0.0
      %742 = vst.msk [vmem:[#allocation3 + $0x28] sm:$0x3] %vm738, 0.0
      %743 = vst.msk [vmem:[#allocation3 + $0x30] sm:$0xff] %vm735, 0.0
      %744 = vst.msk [vmem:[#allocation3 + $0x38] sm:$0xff] %vm735, 0.0
      %745 = vst.msk [vmem:[#allocation3 + $0x40] sm:$0x3] %vm738, 0.0
      %746 = vst.msk [vmem:[#allocation3 + $0x48] sm:$0xff] %vm735, 0.0
      %747 = vst.msk [vmem:[#allocation3 + $0x50] sm:$0xff] %vm735, 0.0
      %748 = vst.msk [vmem:[#allocation3 + $0x58] sm:$0x3] %vm738, 0.0
      %749 = vst.msk [vmem:[#allocation3 + $0x60] sm:$0xff] %vm735, 0.0
      %750 = vst.msk [vmem:[#allocation3 + $0x68] sm:$0xff] %vm735, 0.0
      %751 = vst.msk [vmem:[#allocation3 + $0x70] sm:$0x3] %vm738, 0.0
      %752 = vst.msk [vmem:[#allocation3 + $0x78] sm:$0xff] %vm735, 0.0
      %753 = vst.msk [vmem:[#allocation3 + $0x80] sm:$0xff] %vm735, 0.0
      %754 = vst.msk [vmem:[#allocation3 + $0x88] sm:$0x3] %vm738, 0.0
      %755 = vst.msk [vmem:[#allocation3 + $0x90] sm:$0xff] %vm735, 0.0
      %756 = vst.msk [vmem:[#allocation3 + $0x98] sm:$0xff] %vm735, 0.0
      %757 = vst.msk [vmem:[#allocation3 + $0xa0] sm:$0x3] %vm738, 0.0
      %758 = vst.msk [vmem:[#allocation3 + $0xa8] sm:$0xff] %vm735, 0.0
      %759 = vst.msk [vmem:[#allocation3 + $0xb0] sm:$0xff] %vm735, 0.0
      %760 = vst.msk [vmem:[#allocation3 + $0xb8] sm:$0x3] %vm738, 0.0
      %761 = vst.msk [vmem:[#allocation3 + $0xc0] sm:$0xff] %vm735, 0.0
      %762 = vst.msk [vmem:[#allocation3 + $0xc8] sm:$0xff] %vm735, 0.0
      %763 = vst.msk [vmem:[#allocation3 + $0xd0] sm:$0x3] %vm738, 0.0
      %764 = vst.msk [vmem:[#allocation3 + $0xd8] sm:$0xff] %vm735, 0.0
      %765 = vst.msk [vmem:[#allocation3 + $0xe0] sm:$0xff] %vm735, 0.0
      %766 = vst.msk [vmem:[#allocation3 + $0xe8] sm:$0x3] %vm738, 0.0
      %767 = vst.msk [vmem:[#allocation3 + $0x1] sm:$0xff] %vm735, %v715
      %768 = vst.msk [vmem:[#allocation3 + $0x9] sm:$0xff] %vm735, %v716
      %769 = vst.msk [vmem:[#allocation3 + $0x19] sm:$0xff] %vm735, %v717
      %770 = vst.msk [vmem:[#allocation3 + $0x21] sm:$0xff] %vm735, %v718
      %771 = vst.msk [vmem:[#allocation3 + $0x31] sm:$0xff] %vm735, %v719
      %772 = vst.msk [vmem:[#allocation3 + $0x39] sm:$0xff] %vm735, %v720
      %773 = vst.msk [vmem:[#allocation3 + $0x49] sm:$0xff] %vm735, %v721
      %774 = vst.msk [vmem:[#allocation3 + $0x51] sm:$0xff] %vm735, %v722
      %775 = vst.msk [vmem:[#allocation3 + $0x61] sm:$0xff] %vm735, %v723
      %776 = vst.msk [vmem:[#allocation3 + $0x69] sm:$0xff] %vm735, %v724
      %777 = vst.msk [vmem:[#allocation3 + $0x79] sm:$0xff] %vm735, %v725
      %778 = vst.msk [vmem:[#allocation3 + $0x81] sm:$0xff] %vm735, %v726
      %779 = vst.msk [vmem:[#allocation3 + $0x91] sm:$0xff] %vm735, %v727
      %780 = vst.msk [vmem:[#allocation3 + $0x99] sm:$0xff] %vm735, %v728
      %781 = vst.msk [vmem:[#allocation3 + $0xa9] sm:$0xff] %vm735, %v729
      %782 = vst.msk [vmem:[#allocation3 + $0xb1] sm:$0xff] %vm735, %v730
      %783 = vst.msk [vmem:[#allocation3 + $0xc1] sm:$0xff] %vm735, %v731
      %784 = vst.msk [vmem:[#allocation3 + $0xc9] sm:$0xff] %vm735, %v732
      %785 = vst.msk [vmem:[#allocation3 + $0xd9] sm:$0xff] %vm735, %v733
      %786 = vst.msk [vmem:[#allocation3 + $0xe1] sm:$0xff] %vm735, %v734
      %p787 = scmp.lt.s32.totalorder %s386, 0
      // Predicated region
      $region61: #{tpu_custom_call.1} parent=59 // pred_check
        %p788 = pneg %p787
      $region62: #{tpu_custom_call.1} parent=59 // pred_check_branch
        %790 = sbr.rel (%p788) target = $region64
      $region63: #{tpu_custom_call.1} parent=59 // pred_region
        %791 = vst.msk [vmem:[#allocation3] sm:$0xff] %vm735, 0.0
        %792 = vst.msk [vmem:[#allocation3 + $0x8] sm:$0xff] %vm735, 0.0
        %793 = vst.msk [vmem:[#allocation3 + $0x10] sm:$0x3] %vm738, 0.0
      $region64: #{tpu_custom_call.1} parent=59 // pred_fallthru
        _
      %s794 = sadd.s32 %s385, 9
      %p795 = scmp.gt.s32.totalorder %s794, 16
      // Predicated region
      $region65: #{tpu_custom_call.1} parent=59 // pred_check
        %p796 = pneg %p795
      $region66: #{tpu_custom_call.1} parent=59 // pred_check_branch
        %798 = sbr.rel (%p796) target = $region68
      $region67: #{tpu_custom_call.1} parent=59 // pred_region
        %s799 = scalar_lea.vmem [#allocation3], 216
        %800 = vst.msk [vmem:[%s799] sm:$0xff] %vm735, 0.0
        %801 = vst.msk [vmem:[%s799 + $0x8] sm:$0xff] %vm735, 0.0
        %802 = vst.msk [vmem:[%s799 + $0x10] sm:$0x3] %vm738, 0.0
      $region68: #{tpu_custom_call.1} parent=59 // pred_fallthru
        _
      %v803 = vld [vmem:[#allocation3] sm:$0xff]
      %v804 = vld [vmem:[#allocation3 + $0x8] sm:$0xff]
      %v805 = vld [vmem:[#allocation3 + $0x10] sm:$0x3]
      %v806 = vld [vmem:[#allocation3 + $0x18] sm:$0xff]
      %v807 = vld [vmem:[#allocation3 + $0x20] sm:$0xff]
      %v808 = vld [vmem:[#allocation3 + $0x28] sm:$0x3]
      %v809 = vld [vmem:[#allocation3 + $0x30] sm:$0xff]
      %v810 = vld [vmem:[#allocation3 + $0x38] sm:$0xff]
      %v811 = vld [vmem:[#allocation3 + $0x40] sm:$0x3]
      %v812 = vld [vmem:[#allocation3 + $0x48] sm:$0xff]
      %v813 = vld [vmem:[#allocation3 + $0x50] sm:$0xff]
      %v814 = vld [vmem:[#allocation3 + $0x58] sm:$0x3]
      %v815 = vld [vmem:[#allocation3 + $0x60] sm:$0xff]
      %v816 = vld [vmem:[#allocation3 + $0x68] sm:$0xff]
      %v817 = vld [vmem:[#allocation3 + $0x70] sm:$0x3]
      %v818 = vld [vmem:[#allocation3 + $0x78] sm:$0xff]
      %v819 = vld [vmem:[#allocation3 + $0x80] sm:$0xff]
      %v820 = vld [vmem:[#allocation3 + $0x88] sm:$0x3]
      %v821 = vld [vmem:[#allocation3 + $0x90] sm:$0xff]
      %v822 = vld [vmem:[#allocation3 + $0x98] sm:$0xff]
      %v823 = vld [vmem:[#allocation3 + $0xa0] sm:$0x3]
      %v824 = vld [vmem:[#allocation3 + $0xa8] sm:$0xff]
      %v825 = vld [vmem:[#allocation3 + $0xb0] sm:$0xff]
      %v826 = vld [vmem:[#allocation3 + $0xb8] sm:$0x3]
      %v827 = vld [vmem:[#allocation3 + $0xc0] sm:$0xff]
      %v828 = vld [vmem:[#allocation3 + $0xc8] sm:$0xff]
      %v829 = vld [vmem:[#allocation3 + $0xd0] sm:$0x3]
      %v830 = vld [vmem:[#allocation3 + $0xd8] sm:$0xff]
      %v831 = vld [vmem:[#allocation3 + $0xe0] sm:$0xff]
      %v832 = vld [vmem:[#allocation3 + $0xe8] sm:$0x3]
      %v833 = vld [vmem:[%s4] sm:$0x7]
      %v834 = vld [vmem:[%s4 + $0x4] sm:$0x7]
      %v835 = vld [vmem:[%s4 + $0x8] sm:$0x7]
      %v836 = vperm.slane %v833, 0
      %v837 = vmul.f32 %v803, %v836
      %v838 = vmul.f32 %v804, %v836
      %v839 = vmul.f32 %v806, %v836
      %v840 = vmul.f32 %v807, %v836
      %v841 = vmul.f32 %v809, %v836
      %v842 = vmul.f32 %v810, %v836
      %v843 = vmul.f32 %v812, %v836
      %v844 = vmul.f32 %v813, %v836
      %v845 = vmul.f32 %v815, %v836
      %v846 = vmul.f32 %v816, %v836
      %v847 = vmul.f32 %v818, %v836
      %v848 = vmul.f32 %v819, %v836
      %v849 = vmul.f32 %v821, %v836
      %v850 = vmul.f32 %v822, %v836
      %v851 = vmul.f32 %v824, %v836
      %v852 = vmul.f32 %v825, %v836
      %v853 = vadd.f32 %v837, 0.0
      %v854 = vadd.f32 %v838, 0.0
      %v855 = vadd.f32 %v839, 0.0
      %v856 = vadd.f32 %v840, 0.0
      %v857 = vadd.f32 %v841, 0.0
      %v858 = vadd.f32 %v842, 0.0
      %v859 = vadd.f32 %v843, 0.0
      %v860 = vadd.f32 %v844, 0.0
      %v861 = vadd.f32 %v845, 0.0
      %v862 = vadd.f32 %v846, 0.0
      %v863 = vadd.f32 %v847, 0.0
      %v864 = vadd.f32 %v848, 0.0
      %v865 = vadd.f32 %v849, 0.0
      %v866 = vadd.f32 %v850, 0.0
      %v867 = vadd.f32 %v851, 0.0
      %v868 = vadd.f32 %v852, 0.0
      %v869 = vperm.slane %v833, 1
      %v870 = vmul.f32 %v803, %v869
      %v871 = vmul.f32 %v804, %v869
      %v872 = vmul.f32 %v805, %v869
      %v873 = vmul.f32 %v806, %v869
      %v874 = vmul.f32 %v807, %v869
      %v875 = vmul.f32 %v808, %v869
      %v876 = vmul.f32 %v809, %v869
      %v877 = vmul.f32 %v810, %v869
      %v878 = vmul.f32 %v811, %v869
      %v879 = vmul.f32 %v812, %v869
      %v880 = vmul.f32 %v813, %v869
      %v881 = vmul.f32 %v814, %v869
      %v882 = vmul.f32 %v815, %v869
      %v883 = vmul.f32 %v816, %v869
      %v884 = vmul.f32 %v817, %v869
      %v885 = vmul.f32 %v818, %v869
      %v886 = vmul.f32 %v819, %v869
      %v887 = vmul.f32 %v820, %v869
      %v888 = vmul.f32 %v821, %v869
      %v889 = vmul.f32 %v822, %v869
      %v890 = vmul.f32 %v823, %v869
      %v891 = vmul.f32 %v824, %v869
      %v892 = vmul.f32 %v825, %v869
      %v893 = vmul.f32 %v826, %v869
      %vm918 = vcmask 1046528
      %v919 = vrot.slane %v870, 1
      %v920 = vrot.slane %v871, 1
      %v921 = vsel %vm918, %v919, %v920
      %v922 = vrot.slane %v872, 1
      %v923 = vsel %vm918, %v920, %v922
      %v924 = vrot.slane %v873, 1
      %v925 = vrot.slane %v874, 1
      %v926 = vsel %vm918, %v924, %v925
      %v927 = vrot.slane %v875, 1
      %v928 = vsel %vm918, %v925, %v927
      %v929 = vrot.slane %v876, 1
      %v930 = vrot.slane %v877, 1
      %v931 = vsel %vm918, %v929, %v930
      %v932 = vrot.slane %v878, 1
      %v933 = vsel %vm918, %v930, %v932
      %v934 = vrot.slane %v879, 1
      %v935 = vrot.slane %v880, 1
      %v936 = vsel %vm918, %v934, %v935
      %v937 = vrot.slane %v881, 1
      %v938 = vsel %vm918, %v935, %v937
      %v939 = vrot.slane %v882, 1
      %v940 = vrot.slane %v883, 1
      %v941 = vsel %vm918, %v939, %v940
      %v942 = vrot.slane %v884, 1
      %v943 = vsel %vm918, %v940, %v942
      %v944 = vrot.slane %v885, 1
      %v945 = vrot.slane %v886, 1
      %v946 = vsel %vm918, %v944, %v945
      %v947 = vrot.slane %v887, 1
      %v948 = vsel %vm918, %v945, %v947
      %v949 = vrot.slane %v888, 1
      %v950 = vrot.slane %v889, 1
      %v951 = vsel %vm918, %v949, %v950
      %v952 = vrot.slane %v890, 1
      %v953 = vsel %vm918, %v950, %v952
      %v954 = vrot.slane %v891, 1
      %v955 = vrot.slane %v892, 1
      %v956 = vsel %vm918, %v954, %v955
      %v957 = vrot.slane %v893, 1
      %v958 = vsel %vm918, %v955, %v957
      %v975 = vadd.f32 %v853, %v921
      %v976 = vadd.f32 %v854, %v923
      %v977 = vadd.f32 %v855, %v926
      %v978 = vadd.f32 %v856, %v928
      %v979 = vadd.f32 %v857, %v931
      %v980 = vadd.f32 %v858, %v933
      %v981 = vadd.f32 %v859, %v936
      %v982 = vadd.f32 %v860, %v938
      %v983 = vadd.f32 %v861, %v941
      %v984 = vadd.f32 %v862, %v943
      %v985 = vadd.f32 %v863, %v946
      %v986 = vadd.f32 %v864, %v948
      %v987 = vadd.f32 %v865, %v951
      %v988 = vadd.f32 %v866, %v953
      %v989 = vadd.f32 %v867, %v956
      %v990 = vadd.f32 %v868, %v958
      %v991 = vperm.slane %v833, 2
      %v992 = vmul.f32 %v803, %v991
      %v993 = vmul.f32 %v804, %v991
      %v994 = vmul.f32 %v805, %v991
      %v995 = vmul.f32 %v806, %v991
      %v996 = vmul.f32 %v807, %v991
      %v997 = vmul.f32 %v808, %v991
      %v998 = vmul.f32 %v809, %v991
      %v999 = vmul.f32 %v810, %v991
      %v1000 = vmul.f32 %v811, %v991
      %v1001 = vmul.f32 %v812, %v991
      %v1002 = vmul.f32 %v813, %v991
      %v1003 = vmul.f32 %v814, %v991
      %v1004 = vmul.f32 %v815, %v991
      %v1005 = vmul.f32 %v816, %v991
      %v1006 = vmul.f32 %v817, %v991
      %v1007 = vmul.f32 %v818, %v991
      %v1008 = vmul.f32 %v819, %v991
      %v1009 = vmul.f32 %v820, %v991
      %v1010 = vmul.f32 %v821, %v991
      %v1011 = vmul.f32 %v822, %v991
      %v1012 = vmul.f32 %v823, %v991
      %v1013 = vmul.f32 %v824, %v991
      %v1014 = vmul.f32 %v825, %v991
      %v1015 = vmul.f32 %v826, %v991
      %vm1040 = vcmask 1045504
      %v1041 = vrot.slane %v992, 2
      %v1042 = vrot.slane %v993, 2
      %v1043 = vsel %vm1040, %v1041, %v1042
      %v1044 = vrot.slane %v994, 2
      %v1045 = vsel %vm1040, %v1042, %v1044
      %v1046 = vrot.slane %v995, 2
      %v1047 = vrot.slane %v996, 2
      %v1048 = vsel %vm1040, %v1046, %v1047
      %v1049 = vrot.slane %v997, 2
      %v1050 = vsel %vm1040, %v1047, %v1049
      %v1051 = vrot.slane %v998, 2
      %v1052 = vrot.slane %v999, 2
      %v1053 = vsel %vm1040, %v1051, %v1052
      %v1054 = vrot.slane %v1000, 2
      %v1055 = vsel %vm1040, %v1052, %v1054
      %v1056 = vrot.slane %v1001, 2
      %v1057 = vrot.slane %v1002, 2
      %v1058 = vsel %vm1040, %v1056, %v1057
      %v1059 = vrot.slane %v1003, 2
      %v1060 = vsel %vm1040, %v1057, %v1059
      %v1061 = vrot.slane %v1004, 2
      %v1062 = vrot.slane %v1005, 2
      %v1063 = vsel %vm1040, %v1061, %v1062
      %v1064 = vrot.slane %v1006, 2
      %v1065 = vsel %vm1040, %v1062, %v1064
      %v1066 = vrot.slane %v1007, 2
      %v1067 = vrot.slane %v1008, 2
      %v1068 = vsel %vm1040, %v1066, %v1067
      %v1069 = vrot.slane %v1009, 2
      %v1070 = vsel %vm1040, %v1067, %v1069
      %v1071 = vrot.slane %v1010, 2
      %v1072 = vrot.slane %v1011, 2
      %v1073 = vsel %vm1040, %v1071, %v1072
      %v1074 = vrot.slane %v1012, 2
      %v1075 = vsel %vm1040, %v1072, %v1074
      %v1076 = vrot.slane %v1013, 2
      %v1077 = vrot.slane %v1014, 2
      %v1078 = vsel %vm1040, %v1076, %v1077
      %v1079 = vrot.slane %v1015, 2
      %v1080 = vsel %vm1040, %v1077, %v1079
      %v1097 = vadd.f32 %v975, %v1043
      %v1098 = vadd.f32 %v976, %v1045
      %v1099 = vadd.f32 %v977, %v1048
      %v1100 = vadd.f32 %v978, %v1050
      %v1101 = vadd.f32 %v979, %v1053
      %v1102 = vadd.f32 %v980, %v1055
      %v1103 = vadd.f32 %v981, %v1058
      %v1104 = vadd.f32 %v982, %v1060
      %v1105 = vadd.f32 %v983, %v1063
      %v1106 = vadd.f32 %v984, %v1065
      %v1107 = vadd.f32 %v985, %v1068
      %v1108 = vadd.f32 %v986, %v1070
      %v1109 = vadd.f32 %v987, %v1073
      %v1110 = vadd.f32 %v988, %v1075
      %v1111 = vadd.f32 %v989, %v1078
      %v1112 = vadd.f32 %v990, %v1080
      %v1113 = vperm.slane %v834, 0
      %v1114 = vmul.f32 %v806, %v1113
      %v1115 = vmul.f32 %v807, %v1113
      %v1116 = vmul.f32 %v809, %v1113
      %v1117 = vmul.f32 %v810, %v1113
      %v1118 = vmul.f32 %v812, %v1113
      %v1119 = vmul.f32 %v813, %v1113
      %v1120 = vmul.f32 %v815, %v1113
      %v1121 = vmul.f32 %v816, %v1113
      %v1122 = vmul.f32 %v818, %v1113
      %v1123 = vmul.f32 %v819, %v1113
      %v1124 = vmul.f32 %v821, %v1113
      %v1125 = vmul.f32 %v822, %v1113
      %v1126 = vmul.f32 %v824, %v1113
      %v1127 = vmul.f32 %v825, %v1113
      %v1128 = vmul.f32 %v827, %v1113
      %v1129 = vmul.f32 %v828, %v1113
      %v1130 = vadd.f32 %v1097, %v1114
      %v1131 = vadd.f32 %v1098, %v1115
      %v1132 = vadd.f32 %v1099, %v1116
      %v1133 = vadd.f32 %v1100, %v1117
      %v1134 = vadd.f32 %v1101, %v1118
      %v1135 = vadd.f32 %v1102, %v1119
      %v1136 = vadd.f32 %v1103, %v1120
      %v1137 = vadd.f32 %v1104, %v1121
      %v1138 = vadd.f32 %v1105, %v1122
      %v1139 = vadd.f32 %v1106, %v1123
      %v1140 = vadd.f32 %v1107, %v1124
      %v1141 = vadd.f32 %v1108, %v1125
      %v1142 = vadd.f32 %v1109, %v1126
      %v1143 = vadd.f32 %v1110, %v1127
      %v1144 = vadd.f32 %v1111, %v1128
      %v1145 = vadd.f32 %v1112, %v1129
      %v1146 = vperm.slane %v834, 1
      %v1147 = vmul.f32 %v806, %v1146
      %v1148 = vmul.f32 %v807, %v1146
      %v1149 = vmul.f32 %v808, %v1146
      %v1150 = vmul.f32 %v809, %v1146
      %v1151 = vmul.f32 %v810, %v1146
      %v1152 = vmul.f32 %v811, %v1146
      %v1153 = vmul.f32 %v812, %v1146
      %v1154 = vmul.f32 %v813, %v1146
      %v1155 = vmul.f32 %v814, %v1146
      %v1156 = vmul.f32 %v815, %v1146
      %v1157 = vmul.f32 %v816, %v1146
      %v1158 = vmul.f32 %v817, %v1146
      %v1159 = vmul.f32 %v818, %v1146
      %v1160 = vmul.f32 %v819, %v1146
      %v1161 = vmul.f32 %v820, %v1146
      %v1162 = vmul.f32 %v821, %v1146
      %v1163 = vmul.f32 %v822, %v1146
      %v1164 = vmul.f32 %v823, %v1146
      %v1165 = vmul.f32 %v824, %v1146
      %v1166 = vmul.f32 %v825, %v1146
      %v1167 = vmul.f32 %v826, %v1146
      %v1168 = vmul.f32 %v827, %v1146
      %v1169 = vmul.f32 %v828, %v1146
      %v1170 = vmul.f32 %v829, %v1146
      %v1195 = vrot.slane %v1147, 1
      %v1196 = vrot.slane %v1148, 1
      %v1197 = vsel %vm918, %v1195, %v1196
      %v1198 = vrot.slane %v1149, 1
      %v1199 = vsel %vm918, %v1196, %v1198
      %v1200 = vrot.slane %v1150, 1
      %v1201 = vrot.slane %v1151, 1
      %v1202 = vsel %vm918, %v1200, %v1201
      %v1203 = vrot.slane %v1152, 1
      %v1204 = vsel %vm918, %v1201, %v1203
      %v1205 = vrot.slane %v1153, 1
      %v1206 = vrot.slane %v1154, 1
      %v1207 = vsel %vm918, %v1205, %v1206
      %v1208 = vrot.slane %v1155, 1
      %v1209 = vsel %vm918, %v1206, %v1208
      %v1210 = vrot.slane %v1156, 1
      %v1211 = vrot.slane %v1157, 1
      %v1212 = vsel %vm918, %v1210, %v1211
      %v1213 = vrot.slane %v1158, 1
      %v1214 = vsel %vm918, %v1211, %v1213
      %v1215 = vrot.slane %v1159, 1
      %v1216 = vrot.slane %v1160, 1
      %v1217 = vsel %vm918, %v1215, %v1216
      %v1218 = vrot.slane %v1161, 1
      %v1219 = vsel %vm918, %v1216, %v1218
      %v1220 = vrot.slane %v1162, 1
      %v1221 = vrot.slane %v1163, 1
      %v1222 = vsel %vm918, %v1220, %v1221
      %v1223 = vrot.slane %v1164, 1
      %v1224 = vsel %vm918, %v1221, %v1223
      %v1225 = vrot.slane %v1165, 1
      %v1226 = vrot.slane %v1166, 1
      %v1227 = vsel %vm918, %v1225, %v1226
      %v1228 = vrot.slane %v1167, 1
      %v1229 = vsel %vm918, %v1226, %v1228
      %v1230 = vrot.slane %v1168, 1
      %v1231 = vrot.slane %v1169, 1
      %v1232 = vsel %vm918, %v1230, %v1231
      %v1233 = vrot.slane %v1170, 1
      %v1234 = vsel %vm918, %v1231, %v1233
      %v1251 = vadd.f32 %v1130, %v1197
      %v1252 = vadd.f32 %v1131, %v1199
      %v1253 = vadd.f32 %v1132, %v1202
      %v1254 = vadd.f32 %v1133, %v1204
      %v1255 = vadd.f32 %v1134, %v1207
      %v1256 = vadd.f32 %v1135, %v1209
      %v1257 = vadd.f32 %v1136, %v1212
      %v1258 = vadd.f32 %v1137, %v1214
      %v1259 = vadd.f32 %v1138, %v1217
      %v1260 = vadd.f32 %v1139, %v1219
      %v1261 = vadd.f32 %v1140, %v1222
      %v1262 = vadd.f32 %v1141, %v1224
      %v1263 = vadd.f32 %v1142, %v1227
      %v1264 = vadd.f32 %v1143, %v1229
      %v1265 = vadd.f32 %v1144, %v1232
      %v1266 = vadd.f32 %v1145, %v1234
      %v1267 = vperm.slane %v834, 2
      %v1268 = vmul.f32 %v806, %v1267
      %v1269 = vmul.f32 %v807, %v1267
      %v1270 = vmul.f32 %v808, %v1267
      %v1271 = vmul.f32 %v809, %v1267
      %v1272 = vmul.f32 %v810, %v1267
      %v1273 = vmul.f32 %v811, %v1267
      %v1274 = vmul.f32 %v812, %v1267
      %v1275 = vmul.f32 %v813, %v1267
      %v1276 = vmul.f32 %v814, %v1267
      %v1277 = vmul.f32 %v815, %v1267
      %v1278 = vmul.f32 %v816, %v1267
      %v1279 = vmul.f32 %v817, %v1267
      %v1280 = vmul.f32 %v818, %v1267
      %v1281 = vmul.f32 %v819, %v1267
      %v1282 = vmul.f32 %v820, %v1267
      %v1283 = vmul.f32 %v821, %v1267
      %v1284 = vmul.f32 %v822, %v1267
      %v1285 = vmul.f32 %v823, %v1267
      %v1286 = vmul.f32 %v824, %v1267
      %v1287 = vmul.f32 %v825, %v1267
      %v1288 = vmul.f32 %v826, %v1267
      %v1289 = vmul.f32 %v827, %v1267
      %v1290 = vmul.f32 %v828, %v1267
      %v1291 = vmul.f32 %v829, %v1267
      %v1316 = vrot.slane %v1268, 2
      %v1317 = vrot.slane %v1269, 2
      %v1318 = vsel %vm1040, %v1316, %v1317
      %v1319 = vrot.slane %v1270, 2
      %v1320 = vsel %vm1040, %v1317, %v1319
      %v1321 = vrot.slane %v1271, 2
      %v1322 = vrot.slane %v1272, 2
      %v1323 = vsel %vm1040, %v1321, %v1322
      %v1324 = vrot.slane %v1273, 2
      %v1325 = vsel %vm1040, %v1322, %v1324
      %v1326 = vrot.slane %v1274, 2
      %v1327 = vrot.slane %v1275, 2
      %v1328 = vsel %vm1040, %v1326, %v1327
      %v1329 = vrot.slane %v1276, 2
      %v1330 = vsel %vm1040, %v1327, %v1329
      %v1331 = vrot.slane %v1277, 2
      %v1332 = vrot.slane %v1278, 2
      %v1333 = vsel %vm1040, %v1331, %v1332
      %v1334 = vrot.slane %v1279, 2
      %v1335 = vsel %vm1040, %v1332, %v1334
      %v1336 = vrot.slane %v1280, 2
      %v1337 = vrot.slane %v1281, 2
      %v1338 = vsel %vm1040, %v1336, %v1337
      %v1339 = vrot.slane %v1282, 2
      %v1340 = vsel %vm1040, %v1337, %v1339
      %v1341 = vrot.slane %v1283, 2
      %v1342 = vrot.slane %v1284, 2
      %v1343 = vsel %vm1040, %v1341, %v1342
      %v1344 = vrot.slane %v1285, 2
      %v1345 = vsel %vm1040, %v1342, %v1344
      %v1346 = vrot.slane %v1286, 2
      %v1347 = vrot.slane %v1287, 2
      %v1348 = vsel %vm1040, %v1346, %v1347
      %v1349 = vrot.slane %v1288, 2
      %v1350 = vsel %vm1040, %v1347, %v1349
      %v1351 = vrot.slane %v1289, 2
      %v1352 = vrot.slane %v1290, 2
      %v1353 = vsel %vm1040, %v1351, %v1352
      %v1354 = vrot.slane %v1291, 2
      %v1355 = vsel %vm1040, %v1352, %v1354
      %v1372 = vadd.f32 %v1251, %v1318
      %v1373 = vadd.f32 %v1252, %v1320
      %v1374 = vadd.f32 %v1253, %v1323
      %v1375 = vadd.f32 %v1254, %v1325
      %v1376 = vadd.f32 %v1255, %v1328
      %v1377 = vadd.f32 %v1256, %v1330
      %v1378 = vadd.f32 %v1257, %v1333
      %v1379 = vadd.f32 %v1258, %v1335
      %v1380 = vadd.f32 %v1259, %v1338
      %v1381 = vadd.f32 %v1260, %v1340
      %v1382 = vadd.f32 %v1261, %v1343
      %v1383 = vadd.f32 %v1262, %v1345
      %v1384 = vadd.f32 %v1263, %v1348
      %v1385 = vadd.f32 %v1264, %v1350
      %v1386 = vadd.f32 %v1265, %v1353
      %v1387 = vadd.f32 %v1266, %v1355
      %v1388 = vperm.slane %v835, 0
      %v1389 = vmul.f32 %v809, %v1388
      %v1390 = vmul.f32 %v810, %v1388
      %v1391 = vmul.f32 %v812, %v1388
      %v1392 = vmul.f32 %v813, %v1388
      %v1393 = vmul.f32 %v815, %v1388
      %v1394 = vmul.f32 %v816, %v1388
      %v1395 = vmul.f32 %v818, %v1388
      %v1396 = vmul.f32 %v819, %v1388
      %v1397 = vmul.f32 %v821, %v1388
      %v1398 = vmul.f32 %v822, %v1388
      %v1399 = vmul.f32 %v824, %v1388
      %v1400 = vmul.f32 %v825, %v1388
      %v1401 = vmul.f32 %v827, %v1388
      %v1402 = vmul.f32 %v828, %v1388
      %v1403 = vmul.f32 %v830, %v1388
      %v1404 = vmul.f32 %v831, %v1388
      %v1405 = vadd.f32 %v1372, %v1389
      %v1406 = vadd.f32 %v1373, %v1390
      %v1407 = vadd.f32 %v1374, %v1391
      %v1408 = vadd.f32 %v1375, %v1392
      %v1409 = vadd.f32 %v1376, %v1393
      %v1410 = vadd.f32 %v1377, %v1394
      %v1411 = vadd.f32 %v1378, %v1395
      %v1412 = vadd.f32 %v1379, %v1396
      %v1413 = vadd.f32 %v1380, %v1397
      %v1414 = vadd.f32 %v1381, %v1398
      %v1415 = vadd.f32 %v1382, %v1399
      %v1416 = vadd.f32 %v1383, %v1400
      %v1417 = vadd.f32 %v1384, %v1401
      %v1418 = vadd.f32 %v1385, %v1402
      %v1419 = vadd.f32 %v1386, %v1403
      %v1420 = vadd.f32 %v1387, %v1404
      %v1421 = vperm.slane %v835, 1
      %v1422 = vmul.f32 %v809, %v1421
      %v1423 = vmul.f32 %v810, %v1421
      %v1424 = vmul.f32 %v811, %v1421
      %v1425 = vmul.f32 %v812, %v1421
      %v1426 = vmul.f32 %v813, %v1421
      %v1427 = vmul.f32 %v814, %v1421
      %v1428 = vmul.f32 %v815, %v1421
      %v1429 = vmul.f32 %v816, %v1421
      %v1430 = vmul.f32 %v817, %v1421
      %v1431 = vmul.f32 %v818, %v1421
      %v1432 = vmul.f32 %v819, %v1421
      %v1433 = vmul.f32 %v820, %v1421
      %v1434 = vmul.f32 %v821, %v1421
      %v1435 = vmul.f32 %v822, %v1421
      %v1436 = vmul.f32 %v823, %v1421
      %v1437 = vmul.f32 %v824, %v1421
      %v1438 = vmul.f32 %v825, %v1421
      %v1439 = vmul.f32 %v826, %v1421
      %v1440 = vmul.f32 %v827, %v1421
      %v1441 = vmul.f32 %v828, %v1421
      %v1442 = vmul.f32 %v829, %v1421
      %v1443 = vmul.f32 %v830, %v1421
      %v1444 = vmul.f32 %v831, %v1421
      %v1445 = vmul.f32 %v832, %v1421
      %v1470 = vrot.slane %v1422, 1
      %v1471 = vrot.slane %v1423, 1
      %v1472 = vsel %vm918, %v1470, %v1471
      %v1473 = vrot.slane %v1424, 1
      %v1474 = vsel %vm918, %v1471, %v1473
      %v1475 = vrot.slane %v1425, 1
      %v1476 = vrot.slane %v1426, 1
      %v1477 = vsel %vm918, %v1475, %v1476
      %v1478 = vrot.slane %v1427, 1
      %v1479 = vsel %vm918, %v1476, %v1478
      %v1480 = vrot.slane %v1428, 1
      %v1481 = vrot.slane %v1429, 1
      %v1482 = vsel %vm918, %v1480, %v1481
      %v1483 = vrot.slane %v1430, 1
      %v1484 = vsel %vm918, %v1481, %v1483
      %v1485 = vrot.slane %v1431, 1
      %v1486 = vrot.slane %v1432, 1
      %v1487 = vsel %vm918, %v1485, %v1486
      %v1488 = vrot.slane %v1433, 1
      %v1489 = vsel %vm918, %v1486, %v1488
      %v1490 = vrot.slane %v1434, 1
      %v1491 = vrot.slane %v1435, 1
      %v1492 = vsel %vm918, %v1490, %v1491
      %v1493 = vrot.slane %v1436, 1
      %v1494 = vsel %vm918, %v1491, %v1493
      %v1495 = vrot.slane %v1437, 1
      %v1496 = vrot.slane %v1438, 1
      %v1497 = vsel %vm918, %v1495, %v1496
      %v1498 = vrot.slane %v1439, 1
      %v1499 = vsel %vm918, %v1496, %v1498
      %v1500 = vrot.slane %v1440, 1
      %v1501 = vrot.slane %v1441, 1
      %v1502 = vsel %vm918, %v1500, %v1501
      %v1503 = vrot.slane %v1442, 1
      %v1504 = vsel %vm918, %v1501, %v1503
      %v1505 = vrot.slane %v1443, 1
      %v1506 = vrot.slane %v1444, 1
      %v1507 = vsel %vm918, %v1505, %v1506
      %v1508 = vrot.slane %v1445, 1
      %v1509 = vsel %vm918, %v1506, %v1508
      %v1526 = vadd.f32 %v1405, %v1472
      %v1527 = vadd.f32 %v1406, %v1474
      %v1528 = vadd.f32 %v1407, %v1477
      %v1529 = vadd.f32 %v1408, %v1479
      %v1530 = vadd.f32 %v1409, %v1482
      %v1531 = vadd.f32 %v1410, %v1484
      %v1532 = vadd.f32 %v1411, %v1487
      %v1533 = vadd.f32 %v1412, %v1489
      %v1534 = vadd.f32 %v1413, %v1492
      %v1535 = vadd.f32 %v1414, %v1494
      %v1536 = vadd.f32 %v1415, %v1497
      %v1537 = vadd.f32 %v1416, %v1499
      %v1538 = vadd.f32 %v1417, %v1502
      %v1539 = vadd.f32 %v1418, %v1504
      %v1540 = vadd.f32 %v1419, %v1507
      %v1541 = vadd.f32 %v1420, %v1509
      %v1542 = vperm.slane %v835, 2
      %v1543 = vmul.f32 %v809, %v1542
      %v1544 = vmul.f32 %v810, %v1542
      %v1545 = vmul.f32 %v811, %v1542
      %v1546 = vmul.f32 %v812, %v1542
      %v1547 = vmul.f32 %v813, %v1542
      %v1548 = vmul.f32 %v814, %v1542
      %v1549 = vmul.f32 %v815, %v1542
      %v1550 = vmul.f32 %v816, %v1542
      %v1551 = vmul.f32 %v817, %v1542
      %v1552 = vmul.f32 %v818, %v1542
      %v1553 = vmul.f32 %v819, %v1542
      %v1554 = vmul.f32 %v820, %v1542
      %v1555 = vmul.f32 %v821, %v1542
      %v1556 = vmul.f32 %v822, %v1542
      %v1557 = vmul.f32 %v823, %v1542
      %v1558 = vmul.f32 %v824, %v1542
      %v1559 = vmul.f32 %v825, %v1542
      %v1560 = vmul.f32 %v826, %v1542
      %v1561 = vmul.f32 %v827, %v1542
      %v1562 = vmul.f32 %v828, %v1542
      %v1563 = vmul.f32 %v829, %v1542
      %v1564 = vmul.f32 %v830, %v1542
      %v1565 = vmul.f32 %v831, %v1542
      %v1566 = vmul.f32 %v832, %v1542
      %v1591 = vrot.slane %v1543, 2
      %v1592 = vrot.slane %v1544, 2
      %v1593 = vsel %vm1040, %v1591, %v1592
      %v1594 = vrot.slane %v1545, 2
      %v1595 = vsel %vm1040, %v1592, %v1594
      %v1596 = vrot.slane %v1546, 2
      %v1597 = vrot.slane %v1547, 2
      %v1598 = vsel %vm1040, %v1596, %v1597
      %v1599 = vrot.slane %v1548, 2
      %v1600 = vsel %vm1040, %v1597, %v1599
      %v1601 = vrot.slane %v1549, 2
      %v1602 = vrot.slane %v1550, 2
      %v1603 = vsel %vm1040, %v1601, %v1602
      %v1604 = vrot.slane %v1551, 2
      %v1605 = vsel %vm1040, %v1602, %v1604
      %v1606 = vrot.slane %v1552, 2
      %v1607 = vrot.slane %v1553, 2
      %v1608 = vsel %vm1040, %v1606, %v1607
      %v1609 = vrot.slane %v1554, 2
      %v1610 = vsel %vm1040, %v1607, %v1609
      %v1611 = vrot.slane %v1555, 2
      %v1612 = vrot.slane %v1556, 2
      %v1613 = vsel %vm1040, %v1611, %v1612
      %v1614 = vrot.slane %v1557, 2
      %v1615 = vsel %vm1040, %v1612, %v1614
      %v1616 = vrot.slane %v1558, 2
      %v1617 = vrot.slane %v1559, 2
      %v1618 = vsel %vm1040, %v1616, %v1617
      %v1619 = vrot.slane %v1560, 2
      %v1620 = vsel %vm1040, %v1617, %v1619
      %v1621 = vrot.slane %v1561, 2
      %v1622 = vrot.slane %v1562, 2
      %v1623 = vsel %vm1040, %v1621, %v1622
      %v1624 = vrot.slane %v1563, 2
      %v1625 = vsel %vm1040, %v1622, %v1624
      %v1626 = vrot.slane %v1564, 2
      %v1627 = vrot.slane %v1565, 2
      %v1628 = vsel %vm1040, %v1626, %v1627
      %v1629 = vrot.slane %v1566, 2
      %v1630 = vsel %vm1040, %v1627, %v1629
      %v1647 = vadd.f32 %v1526, %v1593
      %v1648 = vadd.f32 %v1527, %v1595
      %v1649 = vadd.f32 %v1528, %v1598
      %v1650 = vadd.f32 %v1529, %v1600
      %v1651 = vadd.f32 %v1530, %v1603
      %v1652 = vadd.f32 %v1531, %v1605
      %v1653 = vadd.f32 %v1532, %v1608
      %v1654 = vadd.f32 %v1533, %v1610
      %v1655 = vadd.f32 %v1534, %v1613
      %v1656 = vadd.f32 %v1535, %v1615
      %v1657 = vadd.f32 %v1536, %v1618
      %v1658 = vadd.f32 %v1537, %v1620
      %v1659 = vadd.f32 %v1538, %v1623
      %v1660 = vadd.f32 %v1539, %v1625
      %v1661 = vadd.f32 %v1540, %v1628
      %v1662 = vadd.f32 %v1541, %v1630
      %v1663 = vld [vmem:[%s5] sm:$0x1]
      %v1665 = vperm.slane %v1663, 0
      %v1667 = vmul.f32 %v1647, %v1665
      %v1668 = vmul.f32 %v1648, %v1665
      %v1669 = vmul.f32 %v1649, %v1665
      %v1670 = vmul.f32 %v1650, %v1665
      %v1671 = vmul.f32 %v1651, %v1665
      %v1672 = vmul.f32 %v1652, %v1665
      %v1673 = vmul.f32 %v1653, %v1665
      %v1674 = vmul.f32 %v1654, %v1665
      %v1675 = vmul.f32 %v1655, %v1665
      %v1676 = vmul.f32 %v1656, %v1665
      %v1677 = vmul.f32 %v1657, %v1665
      %v1678 = vmul.f32 %v1658, %v1665
      %v1679 = vmul.f32 %v1659, %v1665
      %v1680 = vmul.f32 %v1660, %v1665
      %v1681 = vmul.f32 %v1661, %v1665
      %v1682 = vmul.f32 %v1662, %v1665
      %v1683 = vld [vmem:[%s6] sm:$0x1]
      %v1685 = vperm.slane %v1683, 0
      %v1687 = vadd.f32 %v1667, %v1685
      %v1688 = vadd.f32 %v1668, %v1685
      %v1689 = vadd.f32 %v1669, %v1685
      %v1690 = vadd.f32 %v1670, %v1685
      %v1691 = vadd.f32 %v1671, %v1685
      %v1692 = vadd.f32 %v1672, %v1685
      %v1693 = vadd.f32 %v1673, %v1685
      %v1694 = vadd.f32 %v1674, %v1685
      %v1695 = vadd.f32 %v1675, %v1685
      %v1696 = vadd.f32 %v1676, %v1685
      %v1697 = vadd.f32 %v1677, %v1685
      %v1698 = vadd.f32 %v1678, %v1685
      %v1699 = vadd.f32 %v1679, %v1685
      %v1700 = vadd.f32 %v1680, %v1685
      %v1701 = vadd.f32 %v1681, %v1685
      %v1702 = vadd.f32 %v1682, %v1685
      %v1703 = vmax.f32 %v1687, 0.0
      %v1704 = vmax.f32 %v1688, 0.0
      %v1705 = vmax.f32 %v1689, 0.0
      %v1706 = vmax.f32 %v1690, 0.0
      %v1707 = vmax.f32 %v1691, 0.0
      %v1708 = vmax.f32 %v1692, 0.0
      %v1709 = vmax.f32 %v1693, 0.0
      %v1710 = vmax.f32 %v1694, 0.0
      %v1711 = vmax.f32 %v1695, 0.0
      %v1712 = vmax.f32 %v1696, 0.0
      %v1713 = vmax.f32 %v1697, 0.0
      %v1714 = vmax.f32 %v1698, 0.0
      %v1715 = vmax.f32 %v1699, 0.0
      %v1716 = vmax.f32 %v1700, 0.0
      %v1717 = vmax.f32 %v1701, 0.0
      %v1718 = vmax.f32 %v1702, 0.0
      %v1719 = vld [vmem:[%s7] sm:$0xff]
      %v1720 = vld [vmem:[%s7 + $0x8] sm:$0xff]
      %v1721 = vld [vmem:[%s7 + $0x10] sm:$0xff]
      %v1723 = vsel %vm735, %v1703, 0
      %v1726 = vsel %vm735, %v1704, 0
      %v1729 = vsel %vm735, %v1705, 0
      %v1732 = vsel %vm735, %v1706, 0
      %v1735 = vsel %vm735, %v1707, 0
      %v1738 = vsel %vm735, %v1708, 0
      %v1741 = vsel %vm735, %v1709, 0
      %v1744 = vsel %vm735, %v1710, 0
      %v1747 = vsel %vm735, %v1711, 0
      %v1750 = vsel %vm735, %v1712, 0
      %v1753 = vsel %vm735, %v1713, 0
      %v1756 = vsel %vm735, %v1714, 0
      %v1759 = vsel %vm735, %v1715, 0
      %v1762 = vsel %vm735, %v1716, 0
      %v1765 = vsel %vm735, %v1717, 0
      %v1768 = vsel %vm735, %v1718, 0
      %1770 = vmatpush.msra.mxu0 0.0
      %1771 = vmatpush.msra.mxu0 0.0
      %1772 = vmatpush.msra.mxu0 0.0
      %1773 = vmatpush.msra.mxu0 0.0
      %1774 = vmatpush.msra.mxu0 0.0
      %1775 = vmatpush.msra.mxu0 0.0
      %1776 = vmatpush.msra.mxu0 0.0
      %1777 = vmatpush.msra.mxu0 0.0
      %1778 = vmatpush.msra.mxu0 0.0
      %1779 = vmatpush.msra.mxu0 0.0
      %1780 = vmatpush.msra.mxu0 0.0
      %1781 = vmatpush.msra.mxu0 0.0
      %1782 = vmatpush.msra.mxu0 0.0
      %1783 = vmatpush.msra.mxu0 %v1721
      %1784 = vmatpush.msra.mxu0 %v1720
      %1785 = vmatpush.msra.mxu0 %v1719
      %1786 = vmatmul.f32.gmra.mxu0 %v1723
      %v1787 = vpop.f32.mrf.mxu0
      %v1788 = vadd.f32 0.0, %v1787
      %1789 = vmatmul.f32.gmra.mxu0 %v1726
      %v1790 = vpop.f32.mrf.mxu0
      %v1791 = vadd.f32 0.0, %v1790
      %1792 = vmatmul.f32.gmra.mxu0 %v1729
      %v1793 = vpop.f32.mrf.mxu0
      %v1794 = vadd.f32 0.0, %v1793
      %1795 = vmatmul.f32.gmra.mxu0 %v1732
      %v1796 = vpop.f32.mrf.mxu0
      %v1797 = vadd.f32 0.0, %v1796
      %1798 = vmatmul.f32.gmra.mxu0 %v1735
      %v1799 = vpop.f32.mrf.mxu0
      %v1800 = vadd.f32 0.0, %v1799
      %1801 = vmatmul.f32.gmra.mxu0 %v1738
      %v1802 = vpop.f32.mrf.mxu0
      %v1803 = vadd.f32 0.0, %v1802
      %1804 = vmatmul.f32.gmra.mxu0 %v1741
      %v1805 = vpop.f32.mrf.mxu0
      %v1806 = vadd.f32 0.0, %v1805
      %1807 = vmatmul.f32.gmra.mxu0 %v1744
      %v1808 = vpop.f32.mrf.mxu0
      %v1809 = vadd.f32 0.0, %v1808
      %1810 = vmatmul.f32.gmra.mxu0 %v1747
      %v1811 = vpop.f32.mrf.mxu0
      %v1812 = vadd.f32 0.0, %v1811
      %1813 = vmatmul.f32.gmra.mxu0 %v1750
      %v1814 = vpop.f32.mrf.mxu0
      %v1815 = vadd.f32 0.0, %v1814
      %1816 = vmatmul.f32.gmra.mxu0 %v1753
      %v1817 = vpop.f32.mrf.mxu0
      %v1818 = vadd.f32 0.0, %v1817
      %1819 = vmatmul.f32.gmra.mxu0 %v1756
      %v1820 = vpop.f32.mrf.mxu0
      %v1821 = vadd.f32 0.0, %v1820
      %1822 = vmatmul.f32.gmra.mxu0 %v1759
      %v1823 = vpop.f32.mrf.mxu0
      %v1824 = vadd.f32 0.0, %v1823
      %1825 = vmatmul.f32.gmra.mxu0 %v1762
      %v1826 = vpop.f32.mrf.mxu0
      %v1827 = vadd.f32 0.0, %v1826
      %1828 = vmatmul.f32.gmra.mxu0 %v1765
      %v1829 = vpop.f32.mrf.mxu0
      %v1830 = vadd.f32 0.0, %v1829
      %1831 = vmatmul.f32.gmra.mxu0 %v1768
      %v1832 = vpop.f32.mrf.mxu0
      %v1833 = vadd.f32 0.0, %v1832
      %1834 = vdwg.mxu0
      %v1835 = vld [vmem:[%s8] sm:$0x1]
      %v1837 = vperm.slane %v1835, 0
      %v1839 = vmul.f32 %v1788, %v1837
      %v1840 = vmul.f32 %v1791, %v1837
      %v1841 = vmul.f32 %v1794, %v1837
      %v1842 = vmul.f32 %v1797, %v1837
      %v1843 = vmul.f32 %v1800, %v1837
      %v1844 = vmul.f32 %v1803, %v1837
      %v1845 = vmul.f32 %v1806, %v1837
      %v1846 = vmul.f32 %v1809, %v1837
      %v1847 = vmul.f32 %v1812, %v1837
      %v1848 = vmul.f32 %v1815, %v1837
      %v1849 = vmul.f32 %v1818, %v1837
      %v1850 = vmul.f32 %v1821, %v1837
      %v1851 = vmul.f32 %v1824, %v1837
      %v1852 = vmul.f32 %v1827, %v1837
      %v1853 = vmul.f32 %v1830, %v1837
      %v1854 = vmul.f32 %v1833, %v1837
      %v1855 = vld [vmem:[%s9] sm:$0x1]
      %v1857 = vperm.slane %v1855, 0
      %v1859 = vadd.f32 %v1839, %v1857
      %v1860 = vadd.f32 %v1840, %v1857
      %v1861 = vadd.f32 %v1841, %v1857
      %v1862 = vadd.f32 %v1842, %v1857
      %v1863 = vadd.f32 %v1843, %v1857
      %v1864 = vadd.f32 %v1844, %v1857
      %v1865 = vadd.f32 %v1845, %v1857
      %v1866 = vadd.f32 %v1846, %v1857
      %v1867 = vadd.f32 %v1847, %v1857
      %v1868 = vadd.f32 %v1848, %v1857
      %v1869 = vadd.f32 %v1849, %v1857
      %v1870 = vadd.f32 %v1850, %v1857
      %v1871 = vadd.f32 %v1851, %v1857
      %v1872 = vadd.f32 %v1852, %v1857
      %v1873 = vadd.f32 %v1853, %v1857
      %v1874 = vadd.f32 %v1854, %v1857
      %s1875 = smul.u32 %s385, 16
      %s1876 = scalar_lea.vmem %s373, %s1875
      %v1877 = vld [vmem:[%s1876] sm:$0xff]
      %v1878 = vld [vmem:[%s1876 + $0x8] sm:$0xff]
      %v1879 = vld [vmem:[%s1876 + $0x10] sm:$0xff]
      %v1880 = vld [vmem:[%s1876 + $0x18] sm:$0xff]
      %v1881 = vld [vmem:[%s1876 + $0x20] sm:$0xff]
      %v1882 = vld [vmem:[%s1876 + $0x28] sm:$0xff]
      %v1883 = vld [vmem:[%s1876 + $0x30] sm:$0xff]
      %v1884 = vld [vmem:[%s1876 + $0x38] sm:$0xff]
      %v1885 = vld [vmem:[%s1876 + $0x40] sm:$0xff]
      %v1886 = vld [vmem:[%s1876 + $0x48] sm:$0xff]
      %v1887 = vld [vmem:[%s1876 + $0x50] sm:$0xff]
      %v1888 = vld [vmem:[%s1876 + $0x58] sm:$0xff]
      %v1889 = vld [vmem:[%s1876 + $0x60] sm:$0xff]
      %v1890 = vld [vmem:[%s1876 + $0x68] sm:$0xff]
      %v1891 = vld [vmem:[%s1876 + $0x70] sm:$0xff]
      %v1892 = vld [vmem:[%s1876 + $0x78] sm:$0xff]
      %v1893 = vadd.f32 %v1859, %v1877
      %v1894 = vadd.f32 %v1860, %v1878
      %v1895 = vadd.f32 %v1861, %v1879
      %v1896 = vadd.f32 %v1862, %v1880
      %v1897 = vadd.f32 %v1863, %v1881
      %v1898 = vadd.f32 %v1864, %v1882
      %v1899 = vadd.f32 %v1865, %v1883
      %v1900 = vadd.f32 %v1866, %v1884
      %v1901 = vadd.f32 %v1867, %v1885
      %v1902 = vadd.f32 %v1868, %v1886
      %v1903 = vadd.f32 %v1869, %v1887
      %v1904 = vadd.f32 %v1870, %v1888
      %v1905 = vadd.f32 %v1871, %v1889
      %v1906 = vadd.f32 %v1872, %v1890
      %v1907 = vadd.f32 %v1873, %v1891
      %v1908 = vadd.f32 %v1874, %v1892
      %1909 = vst.msk [vmem:[%s383] sm:$0xff] %vm395, %v1893
      %1910 = vst.msk [vmem:[%s383 + $0x8] sm:$0xff] %vm395, %v1894
      %1911 = vst.msk [vmem:[%s383 + $0x10] sm:$0xff] %vm395, %v1895
      %1912 = vst.msk [vmem:[%s383 + $0x18] sm:$0xff] %vm395, %v1896
      %1913 = vst.msk [vmem:[%s383 + $0x20] sm:$0xff] %vm395, %v1897
      %1914 = vst.msk [vmem:[%s383 + $0x28] sm:$0xff] %vm395, %v1898
      %1915 = vst.msk [vmem:[%s383 + $0x30] sm:$0xff] %vm395, %v1899
      %1916 = vst.msk [vmem:[%s383 + $0x38] sm:$0xff] %vm395, %v1900
      %1917 = vst.msk [vmem:[%s383 + $0x40] sm:$0xff] %vm395, %v1901
      %1918 = vst.msk [vmem:[%s383 + $0x48] sm:$0xff] %vm395, %v1902
      %1919 = vst.msk [vmem:[%s383 + $0x50] sm:$0xff] %vm395, %v1903
      %1920 = vst.msk [vmem:[%s383 + $0x58] sm:$0xff] %vm395, %v1904
      %1921 = vst.msk [vmem:[%s383 + $0x60] sm:$0xff] %vm395, %v1905
      %1922 = vst.msk [vmem:[%s383 + $0x68] sm:$0xff] %vm395, %v1906
      %1923 = vst.msk [vmem:[%s383 + $0x70] sm:$0xff] %vm395, %v1907
      %1924 = vst.msk [vmem:[%s383 + $0x78] sm:$0xff] %vm395, %v1908
      %s1925 = smul.u32 8, %s26
      %p1926 = scmp.lt.s32.totalorder %s25, 1
      %s1927 = scalar_select %p1926, %s25, 1
      %p1928 = scmp.lt.s32.totalorder %s1925, 15
      %s1929 = scalar_select %p1928, %s1925, 15
      %s1930 = smul.addr %s1929, 2
      %s1931 = smul.addr %s1927, 32
      %s1932 = sadd.s32 %s1930, %s1931
      %s1933 = smul.addr %s1932, 8
      %s1934 = scalar_lea.vmem %s10, %s1933
      // Predicated region
      $region69: #{tpu_custom_call.1} parent=59 // pred_check
        %p1935 = pneg %p268
      $region70: #{tpu_custom_call.1} parent=59 // pred_check_branch
        %1937 = sbr.rel (%p1935) target = $region72
      $region71: #{tpu_custom_call.1} parent=59 // pred_region
        %s1938 = smul.u32 8, %s26
      $region72: #{tpu_custom_call.1} parent=59 // pred_fallthru
        _
    $region60: #{tpu_custom_call.1} parent=5 // pred_fallthru
      _
    %p1939 = scmp.le.s32.totalorder 2, %s16
    // Predicated region
    $region73: #{tpu_custom_call.1} parent=5 // pred_check
      %p1940 = pneg %p1939
    $region74: #{tpu_custom_call.1} parent=5 // pred_check_branch
      %1942 = sbr.rel (%p1940) target = $region76
    $region75: #{tpu_custom_call.1} parent=5 // pred_region
      %s1943 = ssub.s32 %s16, 2
      // Predicated region
      $region77: #{tpu_custom_call.1} parent=75 // pred_check
        %p1944 = pneg %p274
      $region78: #{tpu_custom_call.1} parent=75 // pred_check_branch
        %1946 = sbr.rel (%p1944) target = $region80
      $region79: #{tpu_custom_call.1} parent=75 // pred_region
        %s1947 = smul.u32 8, %s28
        %p1948 = scmp.lt.s32.totalorder %s27, 1
        %s1949 = scalar_select %p1948, %s27, 1
        %p1950 = scmp.lt.s32.totalorder %s1947, 15
        %s1951 = scalar_select %p1950, %s1947, 15
        %s1952 = smul.addr %s1951, 2
        %s1953 = smul.addr %s1949, 32
        %s1954 = sadd.s32 %s1952, %s1953
        %s1955 = smul.addr %s1954, 8
        %s1956 = scalar_lea.vmem %s10, %s1955
      $region80: #{tpu_custom_call.1} parent=75 // pred_fallthru
        _
    $region76: #{tpu_custom_call.1} parent=5 // pred_fallthru
      _
  $region6: #{tpu_custom_call.1} parent=0 // loop_footer
    %s20 = sadd.s32 1, %s16
  $region7: #{tpu_custom_call.1} parent=0 // loop_footer_branch
    %15 = sbr.rel target = $region3
  $region8: #{tpu_custom_call.1} parent=0 // loop_exit
    _

</llo_original>
